<compile_context>
chip_gen: v7x
topology: tpu7x:2x2x1
jax: 0.10.0
libtpu: 0.0.40
codegen_flags: <defaults>
</compile_context>

<pallas_src>
import functools

import jax
import jax.numpy as jnp
from jax.experimental import pallas as pl
from jax.experimental.pallas import tpu as pltpu

IN_DIM, H1, H2, OUT_DIM = 6, 256, 128, 5


def _round_up(n, m):
    return ((n + m - 1) // m) * m


def _dqn_kernel(xt_ref, w1_ref, b1_ref, w2_ref, b2_ref, w3_ref, b3_ref, ot_ref):
    xt = xt_ref[...]                      # (6, tile)   f32, batch on lanes
    w1 = w1_ref[...]                      # (256, 6)    f32

    # ---- Layer 1 on the VPU -------------------------------------------------
    # K = 6 would use <5% of an MXU contraction pass; accumulate the six
    # rank-1 outer-product terms with broadcast multiply-adds instead.
    h1 = b1_ref[...] + w1[:, 0:1] * xt[0:1, :]            # (256, tile) f32
    for k in range(1, IN_DIM):
        h1 = h1 + w1[:, k:k + 1] * xt[k:k + 1, :]
    h1 = jnp.maximum(h1, 0.0)

    # ---- Layer 2 on the MXU (bf16 operands, f32 accumulation) ---------------
    h2 = jnp.dot(w2_ref[...], h1.astype(jnp.bfloat16),
                 preferred_element_type=jnp.float32)       # (128, tile) f32
    h2 = jnp.maximum(h2 + b2_ref[...], 0.0)

    # ---- Layer 3 on the MXU --------------------------------------------------
    y = jnp.dot(w3_ref[...], h2.astype(jnp.bfloat16),
                preferred_element_type=jnp.float32) + b3_ref[...]   # (5, tile)
    ot_ref[...] = y.astype(ot_ref.dtype)


@functools.partial(jax.jit, static_argnames=("tile_b",))
def dqn_forward(x, params, *, tile_b=2048):
    """x: (B, 6); params hold PyTorch-layout (out, in) weights + (out,) biases."""
    # Kernel-layout params (all cheap; folded under jit).
    w1 = params["w1"].astype(jnp.float32)                  # (256, 6)   VPU layer
    w2 = params["w2"].astype(jnp.bfloat16)                 # (128, 256) MXU layer
    w3 = params["w3"].astype(jnp.bfloat16)                 # (5, 128)   MXU layer
    b1 = params["b1"].astype(jnp.float32).reshape(H1, 1)
    b2 = params["b2"].astype(jnp.float32).reshape(H2, 1)
    b3 = params["b3"].astype(jnp.float32).reshape(OUT_DIM, 1)

    B = x.shape[0]
    # Batch tile: multiple of 128 (lane axis of every block), clamped to the
    # padded batch so small batches run as a single grid step.
    tile = min(_round_up(max(tile_b, 128), 128), _round_up(B, 128))
    b_pad = _round_up(B, tile)

    xt = jnp.transpose(x.astype(jnp.float32))              # (6, B) feature-major
    if b_pad != B:
        xt = jnp.pad(xt, ((0, 0), (0, b_pad - B)))
    grid = (b_pad // tile,)

    in_specs = [
        pl.BlockSpec((IN_DIM, tile), lambda i: (0, i)),     # x^T  (streamed)
        pl.BlockSpec((H1, IN_DIM), lambda i: (0, 0)),       # W1   (resident)
        pl.BlockSpec((H1, 1), lambda i: (0, 0)),            # b1
        pl.BlockSpec((H2, H1), lambda i: (0, 0)),           # W2
        pl.BlockSpec((H2, 1), lambda i: (0, 0)),            # b2
        pl.BlockSpec((OUT_DIM, H2), lambda i: (0, 0)),      # W3
        pl.BlockSpec((OUT_DIM, 1), lambda i: (0, 0)),       # b3
    ]
    out_specs = pl.BlockSpec((OUT_DIM, tile), lambda i: (0, i))

    weight_bytes = (4 * (H1 * IN_DIM + H1 + H2 + OUT_DIM)
                    + 2 * (H2 * H1 + OUT_DIM * H2))
    cost = pl.CostEstimate(
        flops=2 * b_pad * (IN_DIM * H1 + H1 * H2 + H2 * OUT_DIM),
        transcendentals=0,
        bytes_accessed=b_pad * (IN_DIM + OUT_DIM) * 4 + weight_bytes,
    )

    out_t = pl.pallas_call(
        _dqn_kernel,
        out_shape=jax.ShapeDtypeStruct((OUT_DIM, b_pad), jnp.float32),
        grid=grid,
        in_specs=in_specs,
        out_specs=out_specs,
        compiler_params=pltpu.CompilerParams(
            dimension_semantics=("parallel",),      # free 2x TC sharding on v7x
            vmem_limit_bytes=32 * 1024 * 1024,      # explicit: v5e default ~16 MiB
        ),
        cost_estimate=cost,
    )(xt, w1, b1, w2, b2, w3, b3)

    return jnp.transpose(out_t)[:B]                          # (B, 5)


def init_params(key):
    """PyTorch-faithful init: weight (out,in) ~ N(0, 0.1); bias ~ U(+-1/sqrt(fan_in))."""
    k1, k2, k3, kb1, kb2, kb3 = jax.random.split(key, 6)

    def linear(kw, kb, fan_in, fan_out):
        w = 0.1 * jax.random.normal(kw, (fan_out, fan_in), jnp.float32)
        bound = 1.0 / jnp.sqrt(jnp.float32(fan_in))
        b = jax.random.uniform(kb, (fan_out,), jnp.float32, -bound, bound)
        return w, b

    w1, b1 = linear(k1, kb1, IN_DIM, H1)
    w2, b2 = linear(k2, kb2, H1, H2)
    w3, b3 = linear(k3, kb3, H2, OUT_DIM)
    return {"w1": w1, "b1": b1, "w2": w2, "b2": b2, "w3": w3, "b3": b3}


def _ref_f32(x, p):
    h = jnp.maximum(x @ p["w1"].T + p["b1"], 0.0)
    h = jnp.maximum(h @ p["w2"].T + p["b2"], 0.0)
    return h @ p["w3"].T + p["b3"]


def _ref_mixed(x, p):
    """Reference mirroring the kernel's precision (f32 layer 1, bf16 MXU layers)."""
    hp = jax.lax.Precision.HIGHEST
    h1 = jnp.maximum(jnp.dot(x, p["w1"].T, precision=hp) + p["b1"], 0.0)
    h2 = jnp.dot(h1.astype(jnp.bfloat16), p["w2"].astype(jnp.bfloat16).T,
                 preferred_element_type=jnp.float32) + p["b2"]
    h2 = jnp.maximum(h2, 0.0)
    return jnp.dot(h2.astype(jnp.bfloat16), p["w3"].astype(jnp.bfloat16).T,
                   preferred_element_type=jnp.float32) + p["b3"]


if __name__ == "__main__":
    key = jax.random.PRNGKey(0)
    kp, kx = jax.random.split(key)
    params = init_params(kp)

    # Small batch: single grid step (tile clamped to 128 lanes, batch padded).
    x = jax.random.normal(kx, (16, IN_DIM), jnp.float32)
    out = dqn_forward(x, params)
    jax.block_until_ready(out)
    assert out.shape == (16, OUT_DIM)
    assert jnp.allclose(out, _ref_mixed(x, params), atol=5e-3, rtol=5e-3)
    assert jnp.allclose(out, _ref_f32(x, params), atol=5e-2, rtol=5e-2)

    # Ragged batch with a small tile to exercise multi-step grid + padding path.
    x_big = jax.random.normal(kx, (300, IN_DIM), jnp.float32)
    out_big = dqn_forward(x_big, params, tile_b=128)
    jax.block_until_ready(out_big)
    assert out_big.shape == (300, OUT_DIM)
    assert jnp.allclose(out_big, _ref_mixed(x_big, params), atol=5e-3, rtol=5e-3)
    assert jnp.allclose(out_big, _ref_f32(x_big, params), atol=5e-2, rtol=5e-2)

    print("KERNEL_OK")
</pallas_src>

<mosaic_0001>
module attributes {stable_mosaic.version = 11 : i64} {
  func.func @_dqn_kernel(%arg0: i32, %arg1: memref<6x128xf32, #tpu.memory_space<vmem>>, %arg2: memref<256x6xf32, #tpu.memory_space<vmem>>, %arg3: memref<256x1xf32, #tpu.memory_space<vmem>>, %arg4: memref<128x256xbf16, #tpu.memory_space<vmem>>, %arg5: memref<128x1xf32, #tpu.memory_space<vmem>>, %arg6: memref<5x128xbf16, #tpu.memory_space<vmem>>, %arg7: memref<5x1xf32, #tpu.memory_space<vmem>>, %arg8: memref<5x128xf32, #tpu.memory_space<vmem>>) attributes {dimension_semantics = [#tpu.dimension_semantics<parallel>], iteration_bounds = array<i64: 1>, scalar_prefetch = 0 : i64, scratch_operands = 0 : i64, tpu.core_type = #tpu.core_type<tc>, window_params = [{transform_indices = @transform_0, window_bounds = array<i64: 6, 128>}, {pipeline_mode = #tpu.pipeline_mode<synchronous>, transform_indices = @transform_1, window_bounds = array<i64: 256, 6>}, {pipeline_mode = #tpu.pipeline_mode<synchronous>, transform_indices = @transform_2, window_bounds = array<i64: 256, 1>}, {pipeline_mode = #tpu.pipeline_mode<synchronous>, transform_indices = @transform_3, window_bounds = array<i64: 128, 256>}, {pipeline_mode = #tpu.pipeline_mode<synchronous>, transform_indices = @transform_4, window_bounds = array<i64: 128, 1>}, {pipeline_mode = #tpu.pipeline_mode<synchronous>, transform_indices = @transform_5, window_bounds = array<i64: 5, 128>}, {pipeline_mode = #tpu.pipeline_mode<synchronous>, transform_indices = @transform_6, window_bounds = array<i64: 5, 1>}, {transform_indices = @transform_7, window_bounds = array<i64: 5, 128>}]} {
    %c0 = arith.constant 0 : index
    %c0_0 = arith.constant 0 : index
    %0 = vector.load %arg1[%c0, %c0_0] : memref<6x128xf32, #tpu.memory_space<vmem>>, vector<6x128xf32>
    %c0_1 = arith.constant 0 : index
    %c0_2 = arith.constant 0 : index
    %1 = vector.load %arg2[%c0_1, %c0_2] : memref<256x6xf32, #tpu.memory_space<vmem>>, vector<256x6xf32>
    %c0_3 = arith.constant 0 : index
    %c0_4 = arith.constant 0 : index
    %2 = vector.load %arg3[%c0_3, %c0_4] : memref<256x1xf32, #tpu.memory_space<vmem>>, vector<256x1xf32>
    %3 = vector.extract_strided_slice %1 {offsets = [0, 0], sizes = [256, 1], strides = [1, 1]} : vector<256x6xf32> to vector<256x1xf32>
    %4 = vector.extract_strided_slice %0 {offsets = [0, 0], sizes = [1, 128], strides = [1, 1]} : vector<6x128xf32> to vector<1x128xf32>
    %5 = vector.broadcast %3 : vector<256x1xf32> to vector<256x128xf32>
    %6 = vector.broadcast %4 : vector<1x128xf32> to vector<256x128xf32>
    %7 = arith.mulf %5, %6 : vector<256x128xf32>
    %8 = vector.broadcast %2 : vector<256x1xf32> to vector<256x128xf32>
    %9 = arith.addf %8, %7 : vector<256x128xf32>
    %10 = vector.extract_strided_slice %1 {offsets = [0, 1], sizes = [256, 1], strides = [1, 1]} : vector<256x6xf32> to vector<256x1xf32>
    %11 = vector.extract_strided_slice %0 {offsets = [1, 0], sizes = [1, 128], strides = [1, 1]} : vector<6x128xf32> to vector<1x128xf32>
    %12 = vector.broadcast %10 : vector<256x1xf32> to vector<256x128xf32>
    %13 = vector.broadcast %11 : vector<1x128xf32> to vector<256x128xf32>
    %14 = arith.mulf %12, %13 : vector<256x128xf32>
    %15 = arith.addf %9, %14 : vector<256x128xf32>
    %16 = vector.extract_strided_slice %1 {offsets = [0, 2], sizes = [256, 1], strides = [1, 1]} : vector<256x6xf32> to vector<256x1xf32>
    %17 = vector.extract_strided_slice %0 {offsets = [2, 0], sizes = [1, 128], strides = [1, 1]} : vector<6x128xf32> to vector<1x128xf32>
    %18 = vector.broadcast %16 : vector<256x1xf32> to vector<256x128xf32>
    %19 = vector.broadcast %17 : vector<1x128xf32> to vector<256x128xf32>
    %20 = arith.mulf %18, %19 : vector<256x128xf32>
    %21 = arith.addf %15, %20 : vector<256x128xf32>
    %22 = vector.extract_strided_slice %1 {offsets = [0, 3], sizes = [256, 1], strides = [1, 1]} : vector<256x6xf32> to vector<256x1xf32>
    %23 = vector.extract_strided_slice %0 {offsets = [3, 0], sizes = [1, 128], strides = [1, 1]} : vector<6x128xf32> to vector<1x128xf32>
    %24 = vector.broadcast %22 : vector<256x1xf32> to vector<256x128xf32>
    %25 = vector.broadcast %23 : vector<1x128xf32> to vector<256x128xf32>
    %26 = arith.mulf %24, %25 : vector<256x128xf32>
    %27 = arith.addf %21, %26 : vector<256x128xf32>
    %28 = vector.extract_strided_slice %1 {offsets = [0, 4], sizes = [256, 1], strides = [1, 1]} : vector<256x6xf32> to vector<256x1xf32>
    %29 = vector.extract_strided_slice %0 {offsets = [4, 0], sizes = [1, 128], strides = [1, 1]} : vector<6x128xf32> to vector<1x128xf32>
    %30 = vector.broadcast %28 : vector<256x1xf32> to vector<256x128xf32>
    %31 = vector.broadcast %29 : vector<1x128xf32> to vector<256x128xf32>
    %32 = arith.mulf %30, %31 : vector<256x128xf32>
    %33 = arith.addf %27, %32 : vector<256x128xf32>
    %34 = vector.extract_strided_slice %1 {offsets = [0, 5], sizes = [256, 1], strides = [1, 1]} : vector<256x6xf32> to vector<256x1xf32>
    %35 = vector.extract_strided_slice %0 {offsets = [5, 0], sizes = [1, 128], strides = [1, 1]} : vector<6x128xf32> to vector<1x128xf32>
    %36 = vector.broadcast %34 : vector<256x1xf32> to vector<256x128xf32>
    %37 = vector.broadcast %35 : vector<1x128xf32> to vector<256x128xf32>
    %38 = arith.mulf %36, %37 : vector<256x128xf32>
    %39 = arith.addf %33, %38 : vector<256x128xf32>
    %cst = arith.constant 0.000000e+00 : f32
    %40 = vector.broadcast %cst : f32 to vector<256x128xf32>
    %41 = arith.maximumf %39, %40 : vector<256x128xf32>
    %c0_5 = arith.constant 0 : index
    %c0_6 = arith.constant 0 : index
    %42 = vector.load %arg4[%c0_5, %c0_6] : memref<128x256xbf16, #tpu.memory_space<vmem>>, vector<128x256xbf16>
    %43 = arith.truncf %41 : vector<256x128xf32> to vector<256x128xbf16>
    %cst_7 = arith.constant dense<0.000000e+00> : vector<128x128xf32>
    %44 = tpu.matmul %42, %43, %cst_7 {dimension_numbers = #tpu.dot_dimension_numbers<[1], [0], [0], [1], [0, 0, 1, 1], [], []>} : vector<128x256xbf16>, vector<256x128xbf16>, vector<128x128xf32> -> vector<128x128xf32>
    %c0_8 = arith.constant 0 : index
    %c0_9 = arith.constant 0 : index
    %45 = vector.load %arg5[%c0_8, %c0_9] : memref<128x1xf32, #tpu.memory_space<vmem>>, vector<128x1xf32>
    %46 = vector.broadcast %45 : vector<128x1xf32> to vector<128x128xf32>
    %47 = arith.addf %44, %46 : vector<128x128xf32>
    %cst_10 = arith.constant 0.000000e+00 : f32
    %48 = vector.broadcast %cst_10 : f32 to vector<128x128xf32>
    %49 = arith.maximumf %47, %48 : vector<128x128xf32>
    %c0_11 = arith.constant 0 : index
    %c0_12 = arith.constant 0 : index
    %50 = vector.load %arg6[%c0_11, %c0_12] : memref<5x128xbf16, #tpu.memory_space<vmem>>, vector<5x128xbf16>
    %51 = arith.truncf %49 : vector<128x128xf32> to vector<128x128xbf16>
    %cst_13 = arith.constant dense<0.000000e+00> : vector<5x128xf32>
    %52 = tpu.matmul %50, %51, %cst_13 {dimension_numbers = #tpu.dot_dimension_numbers<[1], [0], [0], [1], [0, 0, 1, 1], [], []>} : vector<5x128xbf16>, vector<128x128xbf16>, vector<5x128xf32> -> vector<5x128xf32>
    %c0_14 = arith.constant 0 : index
    %c0_15 = arith.constant 0 : index
    %53 = vector.load %arg7[%c0_14, %c0_15] : memref<5x1xf32, #tpu.memory_space<vmem>>, vector<5x1xf32>
    %54 = vector.broadcast %53 : vector<5x1xf32> to vector<5x128xf32>
    %55 = arith.addf %52, %54 : vector<5x128xf32>
    %c0_16 = arith.constant 0 : index
    %c0_17 = arith.constant 0 : index
    %56 = vector.load %arg8[%c0_16, %c0_17] : memref<5x128xf32, #tpu.memory_space<vmem>>, vector<5x128xf32>
    tpu.vector_store %arg8[%c0_16, %c0_17], %55 {strides = array<i32>} : memref<5x128xf32, #tpu.memory_space<vmem>>, vector<5x128xf32>,
    return
  }
  func.func @transform_0(%arg0: i32) -> (i32, i32) {
    %c0_i32 = arith.constant 0 : i32
    %c0_i32_0 = arith.constant 0 : i32
    return %c0_i32, %arg0 : i32, i32
  }
  func.func @transform_1(%arg0: i32) -> (i32, i32) {
    %c0_i32 = arith.constant 0 : i32
    %c0_i32_0 = arith.constant 0 : i32
    %c0_i32_1 = arith.constant 0 : i32
    return %c0_i32, %c0_i32_0 : i32, i32
  }
  func.func @transform_2(%arg0: i32) -> (i32, i32) {
    %c0_i32 = arith.constant 0 : i32
    %c0_i32_0 = arith.constant 0 : i32
    %c0_i32_1 = arith.constant 0 : i32
    return %c0_i32, %c0_i32_0 : i32, i32
  }
  func.func @transform_3(%arg0: i32) -> (i32, i32) {
    %c0_i32 = arith.constant 0 : i32
    %c0_i32_0 = arith.constant 0 : i32
    %c0_i32_1 = arith.constant 0 : i32
    return %c0_i32, %c0_i32_0 : i32, i32
  }
  func.func @transform_4(%arg0: i32) -> (i32, i32) {
    %c0_i32 = arith.constant 0 : i32
    %c0_i32_0 = arith.constant 0 : i32
    %c0_i32_1 = arith.constant 0 : i32
    return %c0_i32, %c0_i32_0 : i32, i32
  }
  func.func @transform_5(%arg0: i32) -> (i32, i32) {
    %c0_i32 = arith.constant 0 : i32
    %c0_i32_0 = arith.constant 0 : i32
    %c0_i32_1 = arith.constant 0 : i32
    return %c0_i32, %c0_i32_0 : i32, i32
  }
  func.func @transform_6(%arg0: i32) -> (i32, i32) {
    %c0_i32 = arith.constant 0 : i32
    %c0_i32_0 = arith.constant 0 : i32
    %c0_i32_1 = arith.constant 0 : i32
    return %c0_i32, %c0_i32_0 : i32, i32
  }
  func.func @transform_7(%arg0: i32) -> (i32, i32) {
    %c0_i32 = arith.constant 0 : i32
    %c0_i32_0 = arith.constant 0 : i32
    return %c0_i32, %arg0 : i32, i32
  }
}

</mosaic_0001>

<llo_original>
// kernel: dqn_forward.1
$region0: #{dqn_forward.1}
  #allocation0 [shape = 'u32[]', space=smem, size = 0x4, offset = 0x4, fixed_abs, tag = 'smem constant byte address 0x4 - core index']
  #allocation1 [shape = 'u32[144,128]{1,0:T(1,128)}', space=vmem, size = 0x12000, scoped, tag = 'internal scratch']
  %s0 = inlined_call_operand.vmem [shape: f32[6,128], index: 0, kind: input, shape index: {}]
  %s1 = inlined_call_operand.vmem [shape: f32[256,6], index: 1, kind: input, shape index: {}]
  %s2 = inlined_call_operand.vmem [shape: f32[256,1], index: 2, kind: input, shape index: {}]
  %s3 = inlined_call_operand.vmem [shape: bf16[128,256], index: 3, kind: input, shape index: {}]
  %s4 = inlined_call_operand.vmem [shape: f32[128,1], index: 4, kind: input, shape index: {}]
  %s5 = inlined_call_operand.vmem [shape: bf16[5,128], index: 5, kind: input, shape index: {}]
  %s6 = inlined_call_operand.vmem [shape: f32[5,1], index: 6, kind: input, shape index: {}]
  %s7 = inlined_call_operand.hbm [shape: f32[5,128], index: 7, kind: output, shape index: {}]
  %s8 = sld [smem:[#allocation0]]
  $region38: #{dqn_forward.1} parent=0
    _
  %s10 = ssub.s32 1, %s8
  %s11 = scalar_select 0, %s10, %s8
  $region1: #{dqn_forward.1} parent=0
    #allocation2 [shape = 'u8[4096]{0}', space=vmem, size = 0x1000, scoped, tag = 'output window, operand 0, single buffered']
    #allocation3 [shape = 's32[1]{0}', space=sflag, size = 0x4, scoped, tag = 'scoped memory for dqn_forward.1']
    %12 = vsyncpa [#allocation3], 0
    // Predicated region
    $region2: #{dqn_forward.1} parent=1 // pred_check
      _
    $region3: #{dqn_forward.1} parent=1 // pred_check_branch
      %14 = sbr.rel (0) target = $region5
    $region4: #{dqn_forward.1} parent=1 // pred_region
      _
    $region5: #{dqn_forward.1} parent=1 // pred_fallthru
      _
    // Predicated region
    $region6: #{dqn_forward.1} parent=1 // pred_check
      _
    $region7: #{dqn_forward.1} parent=1 // pred_check_branch
      %16 = sbr.rel (0) target = $region9
    $region8: #{dqn_forward.1} parent=1 // pred_region
      _
    $region9: #{dqn_forward.1} parent=1 // pred_fallthru
      _
    // Predicated region
    $region10: #{dqn_forward.1} parent=1 // pred_check
      _
    $region11: #{dqn_forward.1} parent=1 // pred_check_branch
      %18 = sbr.rel (0) target = $region13
    $region12: #{dqn_forward.1} parent=1 // pred_region
      _
    $region13: #{dqn_forward.1} parent=1 // pred_fallthru
      _
    // Predicated region
    $region14: #{dqn_forward.1} parent=1 // pred_check
      _
    $region15: #{dqn_forward.1} parent=1 // pred_check_branch
      %20 = sbr.rel (0) target = $region17
    $region16: #{dqn_forward.1} parent=1 // pred_region
      _
    $region17: #{dqn_forward.1} parent=1 // pred_fallthru
      _
    // Predicated region
    $region18: #{dqn_forward.1} parent=1 // pred_check
      _
    $region19: #{dqn_forward.1} parent=1 // pred_check_branch
      %22 = sbr.rel (0) target = $region21
    $region20: #{dqn_forward.1} parent=1 // pred_region
      _
    $region21: #{dqn_forward.1} parent=1 // pred_fallthru
      _
    // Predicated region
    $region22: #{dqn_forward.1} parent=1 // pred_check
      _
    $region23: #{dqn_forward.1} parent=1 // pred_check_branch
      %24 = sbr.rel (0) target = $region25
    $region24: #{dqn_forward.1} parent=1 // pred_region
      _
    $region25: #{dqn_forward.1} parent=1 // pred_fallthru
      _
    // Predicated region
    $region26: #{dqn_forward.1} parent=1 // pred_check
      _
    $region27: #{dqn_forward.1} parent=1 // pred_check_branch
      %26 = sbr.rel (0) target = $region29
    $region28: #{dqn_forward.1} parent=1 // pred_region
      _
    $region29: #{dqn_forward.1} parent=1 // pred_fallthru
      _
    %v28 = vld [vmem:[%s0] sm:$0x3f]
    %v29 = vld [vmem:[%s1] sm:$0xff]
    %v30 = vld [vmem:[%s1 + $0x8] sm:$0xff]
    %v31 = vld [vmem:[%s1 + $0x10] sm:$0xff]
    %v32 = vld [vmem:[%s1 + $0x18] sm:$0xff]
    %v33 = vld [vmem:[%s1 + $0x20] sm:$0xff]
    %v34 = vld [vmem:[%s1 + $0x28] sm:$0xff]
    %v35 = vld [vmem:[%s1 + $0x30] sm:$0xff]
    %v36 = vld [vmem:[%s1 + $0x38] sm:$0xff]
    %v37 = vld [vmem:[%s1 + $0x40] sm:$0xff]
    %v38 = vld [vmem:[%s1 + $0x48] sm:$0xff]
    %v39 = vld [vmem:[%s1 + $0x50] sm:$0xff]
    %v40 = vld [vmem:[%s1 + $0x58] sm:$0xff]
    %v41 = vld [vmem:[%s1 + $0x60] sm:$0xff]
    %v42 = vld [vmem:[%s1 + $0x68] sm:$0xff]
    %v43 = vld [vmem:[%s1 + $0x70] sm:$0xff]
    %v44 = vld [vmem:[%s1 + $0x78] sm:$0xff]
    %v45 = vld [vmem:[%s1 + $0x80] sm:$0xff]
    %v46 = vld [vmem:[%s1 + $0x88] sm:$0xff]
    %v47 = vld [vmem:[%s1 + $0x90] sm:$0xff]
    %v48 = vld [vmem:[%s1 + $0x98] sm:$0xff]
    %v49 = vld [vmem:[%s1 + $0xa0] sm:$0xff]
    %v50 = vld [vmem:[%s1 + $0xa8] sm:$0xff]
    %v51 = vld [vmem:[%s1 + $0xb0] sm:$0xff]
    %v52 = vld [vmem:[%s1 + $0xb8] sm:$0xff]
    %v53 = vld [vmem:[%s1 + $0xc0] sm:$0xff]
    %v54 = vld [vmem:[%s1 + $0xc8] sm:$0xff]
    %v55 = vld [vmem:[%s1 + $0xd0] sm:$0xff]
    %v56 = vld [vmem:[%s1 + $0xd8] sm:$0xff]
    %v57 = vld [vmem:[%s1 + $0xe0] sm:$0xff]
    %v58 = vld [vmem:[%s1 + $0xe8] sm:$0xff]
    %v59 = vld [vmem:[%s1 + $0xf0] sm:$0xff]
    %v60 = vld [vmem:[%s1 + $0xf8] sm:$0xff]
    %v61 = vld [vmem:[%s2] sm:$0xff]
    %v62 = vld [vmem:[%s2 + $0x8] sm:$0xff]
    %v63 = vld [vmem:[%s2 + $0x10] sm:$0xff]
    %v64 = vld [vmem:[%s2 + $0x18] sm:$0xff]
    %v65 = vld [vmem:[%s2 + $0x20] sm:$0xff]
    %v66 = vld [vmem:[%s2 + $0x28] sm:$0xff]
    %v67 = vld [vmem:[%s2 + $0x30] sm:$0xff]
    %v68 = vld [vmem:[%s2 + $0x38] sm:$0xff]
    %v69 = vld [vmem:[%s2 + $0x40] sm:$0xff]
    %v70 = vld [vmem:[%s2 + $0x48] sm:$0xff]
    %v71 = vld [vmem:[%s2 + $0x50] sm:$0xff]
    %v72 = vld [vmem:[%s2 + $0x58] sm:$0xff]
    %v73 = vld [vmem:[%s2 + $0x60] sm:$0xff]
    %v74 = vld [vmem:[%s2 + $0x68] sm:$0xff]
    %v75 = vld [vmem:[%s2 + $0x70] sm:$0xff]
    %v76 = vld [vmem:[%s2 + $0x78] sm:$0xff]
    %v77 = vld [vmem:[%s2 + $0x80] sm:$0xff]
    %v78 = vld [vmem:[%s2 + $0x88] sm:$0xff]
    %v79 = vld [vmem:[%s2 + $0x90] sm:$0xff]
    %v80 = vld [vmem:[%s2 + $0x98] sm:$0xff]
    %v81 = vld [vmem:[%s2 + $0xa0] sm:$0xff]
    %v82 = vld [vmem:[%s2 + $0xa8] sm:$0xff]
    %v83 = vld [vmem:[%s2 + $0xb0] sm:$0xff]
    %v84 = vld [vmem:[%s2 + $0xb8] sm:$0xff]
    %v85 = vld [vmem:[%s2 + $0xc0] sm:$0xff]
    %v86 = vld [vmem:[%s2 + $0xc8] sm:$0xff]
    %v87 = vld [vmem:[%s2 + $0xd0] sm:$0xff]
    %v88 = vld [vmem:[%s2 + $0xd8] sm:$0xff]
    %v89 = vld [vmem:[%s2 + $0xe0] sm:$0xff]
    %v90 = vld [vmem:[%s2 + $0xe8] sm:$0xff]
    %v91 = vld [vmem:[%s2 + $0xf0] sm:$0xff]
    %v92 = vld [vmem:[%s2 + $0xf8] sm:$0xff]
    %94 = vset.pattern.permute.xlu0 0
    %95 = vperm.xlu0 %94, %v29
    %v96 = vpop.permute.xlu0 %95
    %99 = vset.pattern.permute.xlu0 0
    %100 = vperm.xlu0 %99, %v30
    %v101 = vpop.permute.xlu0 %100
    %104 = vset.pattern.permute.xlu0 0
    %105 = vperm.xlu0 %104, %v31
    %v106 = vpop.permute.xlu0 %105
    %109 = vset.pattern.permute.xlu0 0
    %110 = vperm.xlu0 %109, %v32
    %v111 = vpop.permute.xlu0 %110
    %114 = vset.pattern.permute.xlu0 0
    %115 = vperm.xlu0 %114, %v33
    %v116 = vpop.permute.xlu0 %115
    %119 = vset.pattern.permute.xlu0 0
    %120 = vperm.xlu0 %119, %v34
    %v121 = vpop.permute.xlu0 %120
    %124 = vset.pattern.permute.xlu0 0
    %125 = vperm.xlu0 %124, %v35
    %v126 = vpop.permute.xlu0 %125
    %129 = vset.pattern.permute.xlu0 0
    %130 = vperm.xlu0 %129, %v36
    %v131 = vpop.permute.xlu0 %130
    %134 = vset.pattern.permute.xlu0 0
    %135 = vperm.xlu0 %134, %v37
    %v136 = vpop.permute.xlu0 %135
    %139 = vset.pattern.permute.xlu0 0
    %140 = vperm.xlu0 %139, %v38
    %v141 = vpop.permute.xlu0 %140
    %144 = vset.pattern.permute.xlu0 0
    %145 = vperm.xlu0 %144, %v39
    %v146 = vpop.permute.xlu0 %145
    %149 = vset.pattern.permute.xlu0 0
    %150 = vperm.xlu0 %149, %v40
    %v151 = vpop.permute.xlu0 %150
    %154 = vset.pattern.permute.xlu0 0
    %155 = vperm.xlu0 %154, %v41
    %v156 = vpop.permute.xlu0 %155
    %159 = vset.pattern.permute.xlu0 0
    %160 = vperm.xlu0 %159, %v42
    %v161 = vpop.permute.xlu0 %160
    %164 = vset.pattern.permute.xlu0 0
    %165 = vperm.xlu0 %164, %v43
    %v166 = vpop.permute.xlu0 %165
    %169 = vset.pattern.permute.xlu0 0
    %170 = vperm.xlu0 %169, %v44
    %v171 = vpop.permute.xlu0 %170
    %174 = vset.pattern.permute.xlu0 0
    %175 = vperm.xlu0 %174, %v45
    %v176 = vpop.permute.xlu0 %175
    %179 = vset.pattern.permute.xlu0 0
    %180 = vperm.xlu0 %179, %v46
    %v181 = vpop.permute.xlu0 %180
    %184 = vset.pattern.permute.xlu0 0
    %185 = vperm.xlu0 %184, %v47
    %v186 = vpop.permute.xlu0 %185
    %189 = vset.pattern.permute.xlu0 0
    %190 = vperm.xlu0 %189, %v48
    %v191 = vpop.permute.xlu0 %190
    %194 = vset.pattern.permute.xlu0 0
    %195 = vperm.xlu0 %194, %v49
    %v196 = vpop.permute.xlu0 %195
    %199 = vset.pattern.permute.xlu0 0
    %200 = vperm.xlu0 %199, %v50
    %v201 = vpop.permute.xlu0 %200
    %204 = vset.pattern.permute.xlu0 0
    %205 = vperm.xlu0 %204, %v51
    %v206 = vpop.permute.xlu0 %205
    %209 = vset.pattern.permute.xlu0 0
    %210 = vperm.xlu0 %209, %v52
    %v211 = vpop.permute.xlu0 %210
    %214 = vset.pattern.permute.xlu0 0
    %215 = vperm.xlu0 %214, %v53
    %v216 = vpop.permute.xlu0 %215
    %219 = vset.pattern.permute.xlu0 0
    %220 = vperm.xlu0 %219, %v54
    %v221 = vpop.permute.xlu0 %220
    %224 = vset.pattern.permute.xlu0 0
    %225 = vperm.xlu0 %224, %v55
    %v226 = vpop.permute.xlu0 %225
    %229 = vset.pattern.permute.xlu0 0
    %230 = vperm.xlu0 %229, %v56
    %v231 = vpop.permute.xlu0 %230
    %234 = vset.pattern.permute.xlu0 0
    %235 = vperm.xlu0 %234, %v57
    %v236 = vpop.permute.xlu0 %235
    %239 = vset.pattern.permute.xlu0 0
    %240 = vperm.xlu0 %239, %v58
    %v241 = vpop.permute.xlu0 %240
    %244 = vset.pattern.permute.xlu0 0
    %245 = vperm.xlu0 %244, %v59
    %v246 = vpop.permute.xlu0 %245
    %249 = vset.pattern.permute.xlu0 0
    %250 = vperm.xlu0 %249, %v60
    %v251 = vpop.permute.xlu0 %250
    %v253 = vlaneseq
    %v254 = vshrl.u32 %v253, 7
    %v255 = vsub.s32 0, %v254
    %v256 = vrot.slane %v28, %v255
    %v257 = vmul.f32 %v96, %v256
    %v258 = vmul.f32 %v101, %v256
    %v259 = vmul.f32 %v106, %v256
    %v260 = vmul.f32 %v111, %v256
    %v261 = vmul.f32 %v116, %v256
    %v262 = vmul.f32 %v121, %v256
    %v263 = vmul.f32 %v126, %v256
    %v264 = vmul.f32 %v131, %v256
    %v265 = vmul.f32 %v136, %v256
    %v266 = vmul.f32 %v141, %v256
    %v267 = vmul.f32 %v146, %v256
    %v268 = vmul.f32 %v151, %v256
    %v269 = vmul.f32 %v156, %v256
    %v270 = vmul.f32 %v161, %v256
    %v271 = vmul.f32 %v166, %v256
    %v272 = vmul.f32 %v171, %v256
    %v273 = vmul.f32 %v176, %v256
    %v274 = vmul.f32 %v181, %v256
    %v275 = vmul.f32 %v186, %v256
    %v276 = vmul.f32 %v191, %v256
    %v277 = vmul.f32 %v196, %v256
    %v278 = vmul.f32 %v201, %v256
    %v279 = vmul.f32 %v206, %v256
    %v280 = vmul.f32 %v211, %v256
    %v281 = vmul.f32 %v216, %v256
    %v282 = vmul.f32 %v221, %v256
    %v283 = vmul.f32 %v226, %v256
    %v284 = vmul.f32 %v231, %v256
    %v285 = vmul.f32 %v236, %v256
    %v286 = vmul.f32 %v241, %v256
    %v287 = vmul.f32 %v246, %v256
    %v288 = vmul.f32 %v251, %v256
    %290 = vset.pattern.permute.xlu0 0
    %291 = vperm.xlu0 %290, %v61
    %v292 = vpop.permute.xlu0 %291
    %295 = vset.pattern.permute.xlu0 0
    %296 = vperm.xlu0 %295, %v62
    %v297 = vpop.permute.xlu0 %296
    %300 = vset.pattern.permute.xlu0 0
    %301 = vperm.xlu0 %300, %v63
    %v302 = vpop.permute.xlu0 %301
    %305 = vset.pattern.permute.xlu0 0
    %306 = vperm.xlu0 %305, %v64
    %v307 = vpop.permute.xlu0 %306
    %310 = vset.pattern.permute.xlu0 0
    %311 = vperm.xlu0 %310, %v65
    %v312 = vpop.permute.xlu0 %311
    %315 = vset.pattern.permute.xlu0 0
    %316 = vperm.xlu0 %315, %v66
    %v317 = vpop.permute.xlu0 %316
    %320 = vset.pattern.permute.xlu0 0
    %321 = vperm.xlu0 %320, %v67
    %v322 = vpop.permute.xlu0 %321
    %325 = vset.pattern.permute.xlu0 0
    %326 = vperm.xlu0 %325, %v68
    %v327 = vpop.permute.xlu0 %326
    %330 = vset.pattern.permute.xlu0 0
    %331 = vperm.xlu0 %330, %v69
    %v332 = vpop.permute.xlu0 %331
    %335 = vset.pattern.permute.xlu0 0
    %336 = vperm.xlu0 %335, %v70
    %v337 = vpop.permute.xlu0 %336
    %340 = vset.pattern.permute.xlu0 0
    %341 = vperm.xlu0 %340, %v71
    %v342 = vpop.permute.xlu0 %341
    %345 = vset.pattern.permute.xlu0 0
    %346 = vperm.xlu0 %345, %v72
    %v347 = vpop.permute.xlu0 %346
    %350 = vset.pattern.permute.xlu0 0
    %351 = vperm.xlu0 %350, %v73
    %v352 = vpop.permute.xlu0 %351
    %355 = vset.pattern.permute.xlu0 0
    %356 = vperm.xlu0 %355, %v74
    %v357 = vpop.permute.xlu0 %356
    %360 = vset.pattern.permute.xlu0 0
    %361 = vperm.xlu0 %360, %v75
    %v362 = vpop.permute.xlu0 %361
    %365 = vset.pattern.permute.xlu0 0
    %366 = vperm.xlu0 %365, %v76
    %v367 = vpop.permute.xlu0 %366
    %370 = vset.pattern.permute.xlu0 0
    %371 = vperm.xlu0 %370, %v77
    %v372 = vpop.permute.xlu0 %371
    %375 = vset.pattern.permute.xlu0 0
    %376 = vperm.xlu0 %375, %v78
    %v377 = vpop.permute.xlu0 %376
    %380 = vset.pattern.permute.xlu0 0
    %381 = vperm.xlu0 %380, %v79
    %v382 = vpop.permute.xlu0 %381
    %385 = vset.pattern.permute.xlu0 0
    %386 = vperm.xlu0 %385, %v80
    %v387 = vpop.permute.xlu0 %386
    %390 = vset.pattern.permute.xlu0 0
    %391 = vperm.xlu0 %390, %v81
    %v392 = vpop.permute.xlu0 %391
    %395 = vset.pattern.permute.xlu0 0
    %396 = vperm.xlu0 %395, %v82
    %v397 = vpop.permute.xlu0 %396
    %400 = vset.pattern.permute.xlu0 0
    %401 = vperm.xlu0 %400, %v83
    %v402 = vpop.permute.xlu0 %401
    %405 = vset.pattern.permute.xlu0 0
    %406 = vperm.xlu0 %405, %v84
    %v407 = vpop.permute.xlu0 %406
    %410 = vset.pattern.permute.xlu0 0
    %411 = vperm.xlu0 %410, %v85
    %v412 = vpop.permute.xlu0 %411
    %415 = vset.pattern.permute.xlu0 0
    %416 = vperm.xlu0 %415, %v86
    %v417 = vpop.permute.xlu0 %416
    %420 = vset.pattern.permute.xlu0 0
    %421 = vperm.xlu0 %420, %v87
    %v422 = vpop.permute.xlu0 %421
    %425 = vset.pattern.permute.xlu0 0
    %426 = vperm.xlu0 %425, %v88
    %v427 = vpop.permute.xlu0 %426
    %430 = vset.pattern.permute.xlu0 0
    %431 = vperm.xlu0 %430, %v89
    %v432 = vpop.permute.xlu0 %431
    %435 = vset.pattern.permute.xlu0 0
    %436 = vperm.xlu0 %435, %v90
    %v437 = vpop.permute.xlu0 %436
    %440 = vset.pattern.permute.xlu0 0
    %441 = vperm.xlu0 %440, %v91
    %v442 = vpop.permute.xlu0 %441
    %445 = vset.pattern.permute.xlu0 0
    %446 = vperm.xlu0 %445, %v92
    %v447 = vpop.permute.xlu0 %446
    %v449 = vadd.f32 %v292, %v257
    %v450 = vadd.f32 %v297, %v258
    %v451 = vadd.f32 %v302, %v259
    %v452 = vadd.f32 %v307, %v260
    %v453 = vadd.f32 %v312, %v261
    %v454 = vadd.f32 %v317, %v262
    %v455 = vadd.f32 %v322, %v263
    %v456 = vadd.f32 %v327, %v264
    %v457 = vadd.f32 %v332, %v265
    %v458 = vadd.f32 %v337, %v266
    %v459 = vadd.f32 %v342, %v267
    %v460 = vadd.f32 %v347, %v268
    %v461 = vadd.f32 %v352, %v269
    %v462 = vadd.f32 %v357, %v270
    %v463 = vadd.f32 %v362, %v271
    %v464 = vadd.f32 %v367, %v272
    %v465 = vadd.f32 %v372, %v273
    %v466 = vadd.f32 %v377, %v274
    %v467 = vadd.f32 %v382, %v275
    %v468 = vadd.f32 %v387, %v276
    %v469 = vadd.f32 %v392, %v277
    %v470 = vadd.f32 %v397, %v278
    %v471 = vadd.f32 %v402, %v279
    %v472 = vadd.f32 %v407, %v280
    %v473 = vadd.f32 %v412, %v281
    %v474 = vadd.f32 %v417, %v282
    %v475 = vadd.f32 %v422, %v283
    %v476 = vadd.f32 %v427, %v284
    %v477 = vadd.f32 %v432, %v285
    %v478 = vadd.f32 %v437, %v286
    %v479 = vadd.f32 %v442, %v287
    %v480 = vadd.f32 %v447, %v288
    %481 = vset.pattern.permute.xlu0 1
    %482 = vperm.xlu0 %481, %v29
    %v483 = vpop.permute.xlu0 %482
    %485 = vset.pattern.permute.xlu0 1
    %486 = vperm.xlu0 %485, %v30
    %v487 = vpop.permute.xlu0 %486
    %489 = vset.pattern.permute.xlu0 1
    %490 = vperm.xlu0 %489, %v31
    %v491 = vpop.permute.xlu0 %490
    %493 = vset.pattern.permute.xlu0 1
    %494 = vperm.xlu0 %493, %v32
    %v495 = vpop.permute.xlu0 %494
    %497 = vset.pattern.permute.xlu0 1
    %498 = vperm.xlu0 %497, %v33
    %v499 = vpop.permute.xlu0 %498
    %501 = vset.pattern.permute.xlu0 1
    %502 = vperm.xlu0 %501, %v34
    %v503 = vpop.permute.xlu0 %502
    %505 = vset.pattern.permute.xlu0 1
    %506 = vperm.xlu0 %505, %v35
    %v507 = vpop.permute.xlu0 %506
    %509 = vset.pattern.permute.xlu0 1
    %510 = vperm.xlu0 %509, %v36
    %v511 = vpop.permute.xlu0 %510
    %513 = vset.pattern.permute.xlu0 1
    %514 = vperm.xlu0 %513, %v37
    %v515 = vpop.permute.xlu0 %514
    %517 = vset.pattern.permute.xlu0 1
    %518 = vperm.xlu0 %517, %v38
    %v519 = vpop.permute.xlu0 %518
    %521 = vset.pattern.permute.xlu0 1
    %522 = vperm.xlu0 %521, %v39
    %v523 = vpop.permute.xlu0 %522
    %525 = vset.pattern.permute.xlu0 1
    %526 = vperm.xlu0 %525, %v40
    %v527 = vpop.permute.xlu0 %526
    %529 = vset.pattern.permute.xlu0 1
    %530 = vperm.xlu0 %529, %v41
    %v531 = vpop.permute.xlu0 %530
    %533 = vset.pattern.permute.xlu0 1
    %534 = vperm.xlu0 %533, %v42
    %v535 = vpop.permute.xlu0 %534
    %537 = vset.pattern.permute.xlu0 1
    %538 = vperm.xlu0 %537, %v43
    %v539 = vpop.permute.xlu0 %538
    %541 = vset.pattern.permute.xlu0 1
    %542 = vperm.xlu0 %541, %v44
    %v543 = vpop.permute.xlu0 %542
    %545 = vset.pattern.permute.xlu0 1
    %546 = vperm.xlu0 %545, %v45
    %v547 = vpop.permute.xlu0 %546
    %549 = vset.pattern.permute.xlu0 1
    %550 = vperm.xlu0 %549, %v46
    %v551 = vpop.permute.xlu0 %550
    %553 = vset.pattern.permute.xlu0 1
    %554 = vperm.xlu0 %553, %v47
    %v555 = vpop.permute.xlu0 %554
    %557 = vset.pattern.permute.xlu0 1
    %558 = vperm.xlu0 %557, %v48
    %v559 = vpop.permute.xlu0 %558
    %561 = vset.pattern.permute.xlu0 1
    %562 = vperm.xlu0 %561, %v49
    %v563 = vpop.permute.xlu0 %562
    %565 = vset.pattern.permute.xlu0 1
    %566 = vperm.xlu0 %565, %v50
    %v567 = vpop.permute.xlu0 %566
    %569 = vset.pattern.permute.xlu0 1
    %570 = vperm.xlu0 %569, %v51
    %v571 = vpop.permute.xlu0 %570
    %573 = vset.pattern.permute.xlu0 1
    %574 = vperm.xlu0 %573, %v52
    %v575 = vpop.permute.xlu0 %574
    %577 = vset.pattern.permute.xlu0 1
    %578 = vperm.xlu0 %577, %v53
    %v579 = vpop.permute.xlu0 %578
    %581 = vset.pattern.permute.xlu0 1
    %582 = vperm.xlu0 %581, %v54
    %v583 = vpop.permute.xlu0 %582
    %585 = vset.pattern.permute.xlu0 1
    %586 = vperm.xlu0 %585, %v55
    %v587 = vpop.permute.xlu0 %586
    %589 = vset.pattern.permute.xlu0 1
    %590 = vperm.xlu0 %589, %v56
    %v591 = vpop.permute.xlu0 %590
    %593 = vset.pattern.permute.xlu0 1
    %594 = vperm.xlu0 %593, %v57
    %v595 = vpop.permute.xlu0 %594
    %597 = vset.pattern.permute.xlu0 1
    %598 = vperm.xlu0 %597, %v58
    %v599 = vpop.permute.xlu0 %598
    %601 = vset.pattern.permute.xlu0 1
    %602 = vperm.xlu0 %601, %v59
    %v603 = vpop.permute.xlu0 %602
    %605 = vset.pattern.permute.xlu0 1
    %606 = vperm.xlu0 %605, %v60
    %v607 = vpop.permute.xlu0 %606
    %v609 = vlaneseq
    %v610 = vshrl.u32 %v609, 7
    %v611 = vsub.s32 1, %v610
    %v612 = vrot.slane %v28, %v611
    %v613 = vmul.f32 %v483, %v612
    %v614 = vmul.f32 %v487, %v612
    %v615 = vmul.f32 %v491, %v612
    %v616 = vmul.f32 %v495, %v612
    %v617 = vmul.f32 %v499, %v612
    %v618 = vmul.f32 %v503, %v612
    %v619 = vmul.f32 %v507, %v612
    %v620 = vmul.f32 %v511, %v612
    %v621 = vmul.f32 %v515, %v612
    %v622 = vmul.f32 %v519, %v612
    %v623 = vmul.f32 %v523, %v612
    %v624 = vmul.f32 %v527, %v612
    %v625 = vmul.f32 %v531, %v612
    %v626 = vmul.f32 %v535, %v612
    %v627 = vmul.f32 %v539, %v612
    %v628 = vmul.f32 %v543, %v612
    %v629 = vmul.f32 %v547, %v612
    %v630 = vmul.f32 %v551, %v612
    %v631 = vmul.f32 %v555, %v612
    %v632 = vmul.f32 %v559, %v612
    %v633 = vmul.f32 %v563, %v612
    %v634 = vmul.f32 %v567, %v612
    %v635 = vmul.f32 %v571, %v612
    %v636 = vmul.f32 %v575, %v612
    %v637 = vmul.f32 %v579, %v612
    %v638 = vmul.f32 %v583, %v612
    %v639 = vmul.f32 %v587, %v612
    %v640 = vmul.f32 %v591, %v612
    %v641 = vmul.f32 %v595, %v612
    %v642 = vmul.f32 %v599, %v612
    %v643 = vmul.f32 %v603, %v612
    %v644 = vmul.f32 %v607, %v612
    %v645 = vadd.f32 %v449, %v613
    %v646 = vadd.f32 %v450, %v614
    %v647 = vadd.f32 %v451, %v615
    %v648 = vadd.f32 %v452, %v616
    %v649 = vadd.f32 %v453, %v617
    %v650 = vadd.f32 %v454, %v618
    %v651 = vadd.f32 %v455, %v619
    %v652 = vadd.f32 %v456, %v620
    %v653 = vadd.f32 %v457, %v621
    %v654 = vadd.f32 %v458, %v622
    %v655 = vadd.f32 %v459, %v623
    %v656 = vadd.f32 %v460, %v624
    %v657 = vadd.f32 %v461, %v625
    %v658 = vadd.f32 %v462, %v626
    %v659 = vadd.f32 %v463, %v627
    %v660 = vadd.f32 %v464, %v628
    %v661 = vadd.f32 %v465, %v629
    %v662 = vadd.f32 %v466, %v630
    %v663 = vadd.f32 %v467, %v631
    %v664 = vadd.f32 %v468, %v632
    %v665 = vadd.f32 %v469, %v633
    %v666 = vadd.f32 %v470, %v634
    %v667 = vadd.f32 %v471, %v635
    %v668 = vadd.f32 %v472, %v636
    %v669 = vadd.f32 %v473, %v637
    %v670 = vadd.f32 %v474, %v638
    %v671 = vadd.f32 %v475, %v639
    %v672 = vadd.f32 %v476, %v640
    %v673 = vadd.f32 %v477, %v641
    %v674 = vadd.f32 %v478, %v642
    %v675 = vadd.f32 %v479, %v643
    %v676 = vadd.f32 %v480, %v644
    %677 = vset.pattern.permute.xlu0 2
    %678 = vperm.xlu0 %677, %v29
    %v679 = vpop.permute.xlu0 %678
    %681 = vset.pattern.permute.xlu0 2
    %682 = vperm.xlu0 %681, %v30
    %v683 = vpop.permute.xlu0 %682
    %685 = vset.pattern.permute.xlu0 2
    %686 = vperm.xlu0 %685, %v31
    %v687 = vpop.permute.xlu0 %686
    %689 = vset.pattern.permute.xlu0 2
    %690 = vperm.xlu0 %689, %v32
    %v691 = vpop.permute.xlu0 %690
    %693 = vset.pattern.permute.xlu0 2
    %694 = vperm.xlu0 %693, %v33
    %v695 = vpop.permute.xlu0 %694
    %697 = vset.pattern.permute.xlu0 2
    %698 = vperm.xlu0 %697, %v34
    %v699 = vpop.permute.xlu0 %698
    %701 = vset.pattern.permute.xlu0 2
    %702 = vperm.xlu0 %701, %v35
    %v703 = vpop.permute.xlu0 %702
    %705 = vset.pattern.permute.xlu0 2
    %706 = vperm.xlu0 %705, %v36
    %v707 = vpop.permute.xlu0 %706
    %709 = vset.pattern.permute.xlu0 2
    %710 = vperm.xlu0 %709, %v37
    %v711 = vpop.permute.xlu0 %710
    %713 = vset.pattern.permute.xlu0 2
    %714 = vperm.xlu0 %713, %v38
    %v715 = vpop.permute.xlu0 %714
    %717 = vset.pattern.permute.xlu0 2
    %718 = vperm.xlu0 %717, %v39
    %v719 = vpop.permute.xlu0 %718
    %721 = vset.pattern.permute.xlu0 2
    %722 = vperm.xlu0 %721, %v40
    %v723 = vpop.permute.xlu0 %722
    %725 = vset.pattern.permute.xlu0 2
    %726 = vperm.xlu0 %725, %v41
    %v727 = vpop.permute.xlu0 %726
    %729 = vset.pattern.permute.xlu0 2
    %730 = vperm.xlu0 %729, %v42
    %v731 = vpop.permute.xlu0 %730
    %733 = vset.pattern.permute.xlu0 2
    %734 = vperm.xlu0 %733, %v43
    %v735 = vpop.permute.xlu0 %734
    %737 = vset.pattern.permute.xlu0 2
    %738 = vperm.xlu0 %737, %v44
    %v739 = vpop.permute.xlu0 %738
    %741 = vset.pattern.permute.xlu0 2
    %742 = vperm.xlu0 %741, %v45
    %v743 = vpop.permute.xlu0 %742
    %745 = vset.pattern.permute.xlu0 2
    %746 = vperm.xlu0 %745, %v46
    %v747 = vpop.permute.xlu0 %746
    %749 = vset.pattern.permute.xlu0 2
    %750 = vperm.xlu0 %749, %v47
    %v751 = vpop.permute.xlu0 %750
    %753 = vset.pattern.permute.xlu0 2
    %754 = vperm.xlu0 %753, %v48
    %v755 = vpop.permute.xlu0 %754
    %757 = vset.pattern.permute.xlu0 2
    %758 = vperm.xlu0 %757, %v49
    %v759 = vpop.permute.xlu0 %758
    %761 = vset.pattern.permute.xlu0 2
    %762 = vperm.xlu0 %761, %v50
    %v763 = vpop.permute.xlu0 %762
    %765 = vset.pattern.permute.xlu0 2
    %766 = vperm.xlu0 %765, %v51
    %v767 = vpop.permute.xlu0 %766
    %769 = vset.pattern.permute.xlu0 2
    %770 = vperm.xlu0 %769, %v52
    %v771 = vpop.permute.xlu0 %770
    %773 = vset.pattern.permute.xlu0 2
    %774 = vperm.xlu0 %773, %v53
    %v775 = vpop.permute.xlu0 %774
    %777 = vset.pattern.permute.xlu0 2
    %778 = vperm.xlu0 %777, %v54
    %v779 = vpop.permute.xlu0 %778
    %781 = vset.pattern.permute.xlu0 2
    %782 = vperm.xlu0 %781, %v55
    %v783 = vpop.permute.xlu0 %782
    %785 = vset.pattern.permute.xlu0 2
    %786 = vperm.xlu0 %785, %v56
    %v787 = vpop.permute.xlu0 %786
    %789 = vset.pattern.permute.xlu0 2
    %790 = vperm.xlu0 %789, %v57
    %v791 = vpop.permute.xlu0 %790
    %793 = vset.pattern.permute.xlu0 2
    %794 = vperm.xlu0 %793, %v58
    %v795 = vpop.permute.xlu0 %794
    %797 = vset.pattern.permute.xlu0 2
    %798 = vperm.xlu0 %797, %v59
    %v799 = vpop.permute.xlu0 %798
    %801 = vset.pattern.permute.xlu0 2
    %802 = vperm.xlu0 %801, %v60
    %v803 = vpop.permute.xlu0 %802
    %v805 = vlaneseq
    %v806 = vshrl.u32 %v805, 7
    %v807 = vsub.s32 2, %v806
    %v808 = vrot.slane %v28, %v807
    %v809 = vmul.f32 %v679, %v808
    %v810 = vmul.f32 %v683, %v808
    %v811 = vmul.f32 %v687, %v808
    %v812 = vmul.f32 %v691, %v808
    %v813 = vmul.f32 %v695, %v808
    %v814 = vmul.f32 %v699, %v808
    %v815 = vmul.f32 %v703, %v808
    %v816 = vmul.f32 %v707, %v808
    %v817 = vmul.f32 %v711, %v808
    %v818 = vmul.f32 %v715, %v808
    %v819 = vmul.f32 %v719, %v808
    %v820 = vmul.f32 %v723, %v808
    %v821 = vmul.f32 %v727, %v808
    %v822 = vmul.f32 %v731, %v808
    %v823 = vmul.f32 %v735, %v808
    %v824 = vmul.f32 %v739, %v808
    %v825 = vmul.f32 %v743, %v808
    %v826 = vmul.f32 %v747, %v808
    %v827 = vmul.f32 %v751, %v808
    %v828 = vmul.f32 %v755, %v808
    %v829 = vmul.f32 %v759, %v808
    %v830 = vmul.f32 %v763, %v808
    %v831 = vmul.f32 %v767, %v808
    %v832 = vmul.f32 %v771, %v808
    %v833 = vmul.f32 %v775, %v808
    %v834 = vmul.f32 %v779, %v808
    %v835 = vmul.f32 %v783, %v808
    %v836 = vmul.f32 %v787, %v808
    %v837 = vmul.f32 %v791, %v808
    %v838 = vmul.f32 %v795, %v808
    %v839 = vmul.f32 %v799, %v808
    %v840 = vmul.f32 %v803, %v808
    %v841 = vadd.f32 %v645, %v809
    %v842 = vadd.f32 %v646, %v810
    %v843 = vadd.f32 %v647, %v811
    %v844 = vadd.f32 %v648, %v812
    %v845 = vadd.f32 %v649, %v813
    %v846 = vadd.f32 %v650, %v814
    %v847 = vadd.f32 %v651, %v815
    %v848 = vadd.f32 %v652, %v816
    %v849 = vadd.f32 %v653, %v817
    %v850 = vadd.f32 %v654, %v818
    %v851 = vadd.f32 %v655, %v819
    %v852 = vadd.f32 %v656, %v820
    %v853 = vadd.f32 %v657, %v821
    %v854 = vadd.f32 %v658, %v822
    %v855 = vadd.f32 %v659, %v823
    %v856 = vadd.f32 %v660, %v824
    %v857 = vadd.f32 %v661, %v825
    %v858 = vadd.f32 %v662, %v826
    %v859 = vadd.f32 %v663, %v827
    %v860 = vadd.f32 %v664, %v828
    %v861 = vadd.f32 %v665, %v829
    %v862 = vadd.f32 %v666, %v830
    %v863 = vadd.f32 %v667, %v831
    %v864 = vadd.f32 %v668, %v832
    %v865 = vadd.f32 %v669, %v833
    %v866 = vadd.f32 %v670, %v834
    %v867 = vadd.f32 %v671, %v835
    %v868 = vadd.f32 %v672, %v836
    %v869 = vadd.f32 %v673, %v837
    %v870 = vadd.f32 %v674, %v838
    %v871 = vadd.f32 %v675, %v839
    %v872 = vadd.f32 %v676, %v840
    %873 = vset.pattern.permute.xlu0 3
    %874 = vperm.xlu0 %873, %v29
    %v875 = vpop.permute.xlu0 %874
    %877 = vset.pattern.permute.xlu0 3
    %878 = vperm.xlu0 %877, %v30
    %v879 = vpop.permute.xlu0 %878
    %881 = vset.pattern.permute.xlu0 3
    %882 = vperm.xlu0 %881, %v31
    %v883 = vpop.permute.xlu0 %882
    %885 = vset.pattern.permute.xlu0 3
    %886 = vperm.xlu0 %885, %v32
    %v887 = vpop.permute.xlu0 %886
    %889 = vset.pattern.permute.xlu0 3
    %890 = vperm.xlu0 %889, %v33
    %v891 = vpop.permute.xlu0 %890
    %893 = vset.pattern.permute.xlu0 3
    %894 = vperm.xlu0 %893, %v34
    %v895 = vpop.permute.xlu0 %894
    %897 = vset.pattern.permute.xlu0 3
    %898 = vperm.xlu0 %897, %v35
    %v899 = vpop.permute.xlu0 %898
    %901 = vset.pattern.permute.xlu0 3
    %902 = vperm.xlu0 %901, %v36
    %v903 = vpop.permute.xlu0 %902
    %905 = vset.pattern.permute.xlu0 3
    %906 = vperm.xlu0 %905, %v37
    %v907 = vpop.permute.xlu0 %906
    %909 = vset.pattern.permute.xlu0 3
    %910 = vperm.xlu0 %909, %v38
    %v911 = vpop.permute.xlu0 %910
    %913 = vset.pattern.permute.xlu0 3
    %914 = vperm.xlu0 %913, %v39
    %v915 = vpop.permute.xlu0 %914
    %917 = vset.pattern.permute.xlu0 3
    %918 = vperm.xlu0 %917, %v40
    %v919 = vpop.permute.xlu0 %918
    %921 = vset.pattern.permute.xlu0 3
    %922 = vperm.xlu0 %921, %v41
    %v923 = vpop.permute.xlu0 %922
    %925 = vset.pattern.permute.xlu0 3
    %926 = vperm.xlu0 %925, %v42
    %v927 = vpop.permute.xlu0 %926
    %929 = vset.pattern.permute.xlu0 3
    %930 = vperm.xlu0 %929, %v43
    %v931 = vpop.permute.xlu0 %930
    %933 = vset.pattern.permute.xlu0 3
    %934 = vperm.xlu0 %933, %v44
    %v935 = vpop.permute.xlu0 %934
    %937 = vset.pattern.permute.xlu0 3
    %938 = vperm.xlu0 %937, %v45
    %v939 = vpop.permute.xlu0 %938
    %941 = vset.pattern.permute.xlu0 3
    %942 = vperm.xlu0 %941, %v46
    %v943 = vpop.permute.xlu0 %942
    %945 = vset.pattern.permute.xlu0 3
    %946 = vperm.xlu0 %945, %v47
    %v947 = vpop.permute.xlu0 %946
    %949 = vset.pattern.permute.xlu0 3
    %950 = vperm.xlu0 %949, %v48
    %v951 = vpop.permute.xlu0 %950
    %953 = vset.pattern.permute.xlu0 3
    %954 = vperm.xlu0 %953, %v49
    %v955 = vpop.permute.xlu0 %954
    %957 = vset.pattern.permute.xlu0 3
    %958 = vperm.xlu0 %957, %v50
    %v959 = vpop.permute.xlu0 %958
    %961 = vset.pattern.permute.xlu0 3
    %962 = vperm.xlu0 %961, %v51
    %v963 = vpop.permute.xlu0 %962
    %965 = vset.pattern.permute.xlu0 3
    %966 = vperm.xlu0 %965, %v52
    %v967 = vpop.permute.xlu0 %966
    %969 = vset.pattern.permute.xlu0 3
    %970 = vperm.xlu0 %969, %v53
    %v971 = vpop.permute.xlu0 %970
    %973 = vset.pattern.permute.xlu0 3
    %974 = vperm.xlu0 %973, %v54
    %v975 = vpop.permute.xlu0 %974
    %977 = vset.pattern.permute.xlu0 3
    %978 = vperm.xlu0 %977, %v55
    %v979 = vpop.permute.xlu0 %978
    %981 = vset.pattern.permute.xlu0 3
    %982 = vperm.xlu0 %981, %v56
    %v983 = vpop.permute.xlu0 %982
    %985 = vset.pattern.permute.xlu0 3
    %986 = vperm.xlu0 %985, %v57
    %v987 = vpop.permute.xlu0 %986
    %989 = vset.pattern.permute.xlu0 3
    %990 = vperm.xlu0 %989, %v58
    %v991 = vpop.permute.xlu0 %990
    %993 = vset.pattern.permute.xlu0 3
    %994 = vperm.xlu0 %993, %v59
    %v995 = vpop.permute.xlu0 %994
    %997 = vset.pattern.permute.xlu0 3
    %998 = vperm.xlu0 %997, %v60
    %v999 = vpop.permute.xlu0 %998
    %v1001 = vlaneseq
    %v1002 = vshrl.u32 %v1001, 7
    %v1003 = vsub.s32 3, %v1002
    %v1004 = vrot.slane %v28, %v1003
    %v1005 = vmul.f32 %v875, %v1004
    %v1006 = vmul.f32 %v879, %v1004
    %v1007 = vmul.f32 %v883, %v1004
    %v1008 = vmul.f32 %v887, %v1004
    %v1009 = vmul.f32 %v891, %v1004
    %v1010 = vmul.f32 %v895, %v1004
    %v1011 = vmul.f32 %v899, %v1004
    %v1012 = vmul.f32 %v903, %v1004
    %v1013 = vmul.f32 %v907, %v1004
    %v1014 = vmul.f32 %v911, %v1004
    %v1015 = vmul.f32 %v915, %v1004
    %v1016 = vmul.f32 %v919, %v1004
    %v1017 = vmul.f32 %v923, %v1004
    %v1018 = vmul.f32 %v927, %v1004
    %v1019 = vmul.f32 %v931, %v1004
    %v1020 = vmul.f32 %v935, %v1004
    %v1021 = vmul.f32 %v939, %v1004
    %v1022 = vmul.f32 %v943, %v1004
    %v1023 = vmul.f32 %v947, %v1004
    %v1024 = vmul.f32 %v951, %v1004
    %v1025 = vmul.f32 %v955, %v1004
    %v1026 = vmul.f32 %v959, %v1004
    %v1027 = vmul.f32 %v963, %v1004
    %v1028 = vmul.f32 %v967, %v1004
    %v1029 = vmul.f32 %v971, %v1004
    %v1030 = vmul.f32 %v975, %v1004
    %v1031 = vmul.f32 %v979, %v1004
    %v1032 = vmul.f32 %v983, %v1004
    %v1033 = vmul.f32 %v987, %v1004
    %v1034 = vmul.f32 %v991, %v1004
    %v1035 = vmul.f32 %v995, %v1004
    %v1036 = vmul.f32 %v999, %v1004
    %v1037 = vadd.f32 %v841, %v1005
    %v1038 = vadd.f32 %v842, %v1006
    %v1039 = vadd.f32 %v843, %v1007
    %v1040 = vadd.f32 %v844, %v1008
    %v1041 = vadd.f32 %v845, %v1009
    %v1042 = vadd.f32 %v846, %v1010
    %v1043 = vadd.f32 %v847, %v1011
    %v1044 = vadd.f32 %v848, %v1012
    %v1045 = vadd.f32 %v849, %v1013
    %v1046 = vadd.f32 %v850, %v1014
    %v1047 = vadd.f32 %v851, %v1015
    %v1048 = vadd.f32 %v852, %v1016
    %v1049 = vadd.f32 %v853, %v1017
    %v1050 = vadd.f32 %v854, %v1018
    %v1051 = vadd.f32 %v855, %v1019
    %v1052 = vadd.f32 %v856, %v1020
    %v1053 = vadd.f32 %v857, %v1021
    %v1054 = vadd.f32 %v858, %v1022
    %v1055 = vadd.f32 %v859, %v1023
    %v1056 = vadd.f32 %v860, %v1024
    %v1057 = vadd.f32 %v861, %v1025
    %v1058 = vadd.f32 %v862, %v1026
    %v1059 = vadd.f32 %v863, %v1027
    %v1060 = vadd.f32 %v864, %v1028
    %v1061 = vadd.f32 %v865, %v1029
    %v1062 = vadd.f32 %v866, %v1030
    %v1063 = vadd.f32 %v867, %v1031
    %v1064 = vadd.f32 %v868, %v1032
    %v1065 = vadd.f32 %v869, %v1033
    %v1066 = vadd.f32 %v870, %v1034
    %v1067 = vadd.f32 %v871, %v1035
    %v1068 = vadd.f32 %v872, %v1036
    %1069 = vset.pattern.permute.xlu0 4
    %1070 = vperm.xlu0 %1069, %v29
    %v1071 = vpop.permute.xlu0 %1070
    %1073 = vset.pattern.permute.xlu0 4
    %1074 = vperm.xlu0 %1073, %v30
    %v1075 = vpop.permute.xlu0 %1074
    %1077 = vset.pattern.permute.xlu0 4
    %1078 = vperm.xlu0 %1077, %v31
    %v1079 = vpop.permute.xlu0 %1078
    %1081 = vset.pattern.permute.xlu0 4
    %1082 = vperm.xlu0 %1081, %v32
    %v1083 = vpop.permute.xlu0 %1082
    %1085 = vset.pattern.permute.xlu0 4
    %1086 = vperm.xlu0 %1085, %v33
    %v1087 = vpop.permute.xlu0 %1086
    %1089 = vset.pattern.permute.xlu0 4
    %1090 = vperm.xlu0 %1089, %v34
    %v1091 = vpop.permute.xlu0 %1090
    %1093 = vset.pattern.permute.xlu0 4
    %1094 = vperm.xlu0 %1093, %v35
    %v1095 = vpop.permute.xlu0 %1094
    %1097 = vset.pattern.permute.xlu0 4
    %1098 = vperm.xlu0 %1097, %v36
    %v1099 = vpop.permute.xlu0 %1098
    %1101 = vset.pattern.permute.xlu0 4
    %1102 = vperm.xlu0 %1101, %v37
    %v1103 = vpop.permute.xlu0 %1102
    %1105 = vset.pattern.permute.xlu0 4
    %1106 = vperm.xlu0 %1105, %v38
    %v1107 = vpop.permute.xlu0 %1106
    %1109 = vset.pattern.permute.xlu0 4
    %1110 = vperm.xlu0 %1109, %v39
    %v1111 = vpop.permute.xlu0 %1110
    %1113 = vset.pattern.permute.xlu0 4
    %1114 = vperm.xlu0 %1113, %v40
    %v1115 = vpop.permute.xlu0 %1114
    %1117 = vset.pattern.permute.xlu0 4
    %1118 = vperm.xlu0 %1117, %v41
    %v1119 = vpop.permute.xlu0 %1118
    %1121 = vset.pattern.permute.xlu0 4
    %1122 = vperm.xlu0 %1121, %v42
    %v1123 = vpop.permute.xlu0 %1122
    %1125 = vset.pattern.permute.xlu0 4
    %1126 = vperm.xlu0 %1125, %v43
    %v1127 = vpop.permute.xlu0 %1126
    %1129 = vset.pattern.permute.xlu0 4
    %1130 = vperm.xlu0 %1129, %v44
    %v1131 = vpop.permute.xlu0 %1130
    %1133 = vset.pattern.permute.xlu0 4
    %1134 = vperm.xlu0 %1133, %v45
    %v1135 = vpop.permute.xlu0 %1134
    %1137 = vset.pattern.permute.xlu0 4
    %1138 = vperm.xlu0 %1137, %v46
    %v1139 = vpop.permute.xlu0 %1138
    %1141 = vset.pattern.permute.xlu0 4
    %1142 = vperm.xlu0 %1141, %v47
    %v1143 = vpop.permute.xlu0 %1142
    %1145 = vset.pattern.permute.xlu0 4
    %1146 = vperm.xlu0 %1145, %v48
    %v1147 = vpop.permute.xlu0 %1146
    %1149 = vset.pattern.permute.xlu0 4
    %1150 = vperm.xlu0 %1149, %v49
    %v1151 = vpop.permute.xlu0 %1150
    %1153 = vset.pattern.permute.xlu0 4
    %1154 = vperm.xlu0 %1153, %v50
    %v1155 = vpop.permute.xlu0 %1154
    %1157 = vset.pattern.permute.xlu0 4
    %1158 = vperm.xlu0 %1157, %v51
    %v1159 = vpop.permute.xlu0 %1158
    %1161 = vset.pattern.permute.xlu0 4
    %1162 = vperm.xlu0 %1161, %v52
    %v1163 = vpop.permute.xlu0 %1162
    %1165 = vset.pattern.permute.xlu0 4
    %1166 = vperm.xlu0 %1165, %v53
    %v1167 = vpop.permute.xlu0 %1166
    %1169 = vset.pattern.permute.xlu0 4
    %1170 = vperm.xlu0 %1169, %v54
    %v1171 = vpop.permute.xlu0 %1170
    %1173 = vset.pattern.permute.xlu0 4
    %1174 = vperm.xlu0 %1173, %v55
    %v1175 = vpop.permute.xlu0 %1174
    %1177 = vset.pattern.permute.xlu0 4
    %1178 = vperm.xlu0 %1177, %v56
    %v1179 = vpop.permute.xlu0 %1178
    %1181 = vset.pattern.permute.xlu0 4
    %1182 = vperm.xlu0 %1181, %v57
    %v1183 = vpop.permute.xlu0 %1182
    %1185 = vset.pattern.permute.xlu0 4
    %1186 = vperm.xlu0 %1185, %v58
    %v1187 = vpop.permute.xlu0 %1186
    %1189 = vset.pattern.permute.xlu0 4
    %1190 = vperm.xlu0 %1189, %v59
    %v1191 = vpop.permute.xlu0 %1190
    %1193 = vset.pattern.permute.xlu0 4
    %1194 = vperm.xlu0 %1193, %v60
    %v1195 = vpop.permute.xlu0 %1194
    %v1197 = vlaneseq
    %v1198 = vshrl.u32 %v1197, 7
    %v1199 = vsub.s32 4, %v1198
    %v1200 = vrot.slane %v28, %v1199
    %v1201 = vmul.f32 %v1071, %v1200
    %v1202 = vmul.f32 %v1075, %v1200
    %v1203 = vmul.f32 %v1079, %v1200
    %v1204 = vmul.f32 %v1083, %v1200
    %v1205 = vmul.f32 %v1087, %v1200
    %v1206 = vmul.f32 %v1091, %v1200
    %v1207 = vmul.f32 %v1095, %v1200
    %v1208 = vmul.f32 %v1099, %v1200
    %v1209 = vmul.f32 %v1103, %v1200
    %v1210 = vmul.f32 %v1107, %v1200
    %v1211 = vmul.f32 %v1111, %v1200
    %v1212 = vmul.f32 %v1115, %v1200
    %v1213 = vmul.f32 %v1119, %v1200
    %v1214 = vmul.f32 %v1123, %v1200
    %v1215 = vmul.f32 %v1127, %v1200
    %v1216 = vmul.f32 %v1131, %v1200
    %v1217 = vmul.f32 %v1135, %v1200
    %v1218 = vmul.f32 %v1139, %v1200
    %v1219 = vmul.f32 %v1143, %v1200
    %v1220 = vmul.f32 %v1147, %v1200
    %v1221 = vmul.f32 %v1151, %v1200
    %v1222 = vmul.f32 %v1155, %v1200
    %v1223 = vmul.f32 %v1159, %v1200
    %v1224 = vmul.f32 %v1163, %v1200
    %v1225 = vmul.f32 %v1167, %v1200
    %v1226 = vmul.f32 %v1171, %v1200
    %v1227 = vmul.f32 %v1175, %v1200
    %v1228 = vmul.f32 %v1179, %v1200
    %v1229 = vmul.f32 %v1183, %v1200
    %v1230 = vmul.f32 %v1187, %v1200
    %v1231 = vmul.f32 %v1191, %v1200
    %v1232 = vmul.f32 %v1195, %v1200
    %v1233 = vadd.f32 %v1037, %v1201
    %v1234 = vadd.f32 %v1038, %v1202
    %v1235 = vadd.f32 %v1039, %v1203
    %v1236 = vadd.f32 %v1040, %v1204
    %v1237 = vadd.f32 %v1041, %v1205
    %v1238 = vadd.f32 %v1042, %v1206
    %v1239 = vadd.f32 %v1043, %v1207
    %v1240 = vadd.f32 %v1044, %v1208
    %v1241 = vadd.f32 %v1045, %v1209
    %v1242 = vadd.f32 %v1046, %v1210
    %v1243 = vadd.f32 %v1047, %v1211
    %v1244 = vadd.f32 %v1048, %v1212
    %v1245 = vadd.f32 %v1049, %v1213
    %v1246 = vadd.f32 %v1050, %v1214
    %v1247 = vadd.f32 %v1051, %v1215
    %v1248 = vadd.f32 %v1052, %v1216
    %v1249 = vadd.f32 %v1053, %v1217
    %v1250 = vadd.f32 %v1054, %v1218
    %v1251 = vadd.f32 %v1055, %v1219
    %v1252 = vadd.f32 %v1056, %v1220
    %v1253 = vadd.f32 %v1057, %v1221
    %v1254 = vadd.f32 %v1058, %v1222
    %v1255 = vadd.f32 %v1059, %v1223
    %v1256 = vadd.f32 %v1060, %v1224
    %v1257 = vadd.f32 %v1061, %v1225
    %v1258 = vadd.f32 %v1062, %v1226
    %v1259 = vadd.f32 %v1063, %v1227
    %v1260 = vadd.f32 %v1064, %v1228
    %v1261 = vadd.f32 %v1065, %v1229
    %v1262 = vadd.f32 %v1066, %v1230
    %v1263 = vadd.f32 %v1067, %v1231
    %v1264 = vadd.f32 %v1068, %v1232
    %1265 = vset.pattern.permute.xlu0 5
    %1266 = vperm.xlu0 %1265, %v29
    %v1267 = vpop.permute.xlu0 %1266
    %1269 = vset.pattern.permute.xlu0 5
    %1270 = vperm.xlu0 %1269, %v30
    %v1271 = vpop.permute.xlu0 %1270
    %1273 = vset.pattern.permute.xlu0 5
    %1274 = vperm.xlu0 %1273, %v31
    %v1275 = vpop.permute.xlu0 %1274
    %1277 = vset.pattern.permute.xlu0 5
    %1278 = vperm.xlu0 %1277, %v32
    %v1279 = vpop.permute.xlu0 %1278
    %1281 = vset.pattern.permute.xlu0 5
    %1282 = vperm.xlu0 %1281, %v33
    %v1283 = vpop.permute.xlu0 %1282
    %1285 = vset.pattern.permute.xlu0 5
    %1286 = vperm.xlu0 %1285, %v34
    %v1287 = vpop.permute.xlu0 %1286
    %1289 = vset.pattern.permute.xlu0 5
    %1290 = vperm.xlu0 %1289, %v35
    %v1291 = vpop.permute.xlu0 %1290
    %1293 = vset.pattern.permute.xlu0 5
    %1294 = vperm.xlu0 %1293, %v36
    %v1295 = vpop.permute.xlu0 %1294
    %1297 = vset.pattern.permute.xlu0 5
    %1298 = vperm.xlu0 %1297, %v37
    %v1299 = vpop.permute.xlu0 %1298
    %1301 = vset.pattern.permute.xlu0 5
    %1302 = vperm.xlu0 %1301, %v38
    %v1303 = vpop.permute.xlu0 %1302
    %1305 = vset.pattern.permute.xlu0 5
    %1306 = vperm.xlu0 %1305, %v39
    %v1307 = vpop.permute.xlu0 %1306
    %1309 = vset.pattern.permute.xlu0 5
    %1310 = vperm.xlu0 %1309, %v40
    %v1311 = vpop.permute.xlu0 %1310
    %1313 = vset.pattern.permute.xlu0 5
    %1314 = vperm.xlu0 %1313, %v41
    %v1315 = vpop.permute.xlu0 %1314
    %1317 = vset.pattern.permute.xlu0 5
    %1318 = vperm.xlu0 %1317, %v42
    %v1319 = vpop.permute.xlu0 %1318
    %1321 = vset.pattern.permute.xlu0 5
    %1322 = vperm.xlu0 %1321, %v43
    %v1323 = vpop.permute.xlu0 %1322
    %1325 = vset.pattern.permute.xlu0 5
    %1326 = vperm.xlu0 %1325, %v44
    %v1327 = vpop.permute.xlu0 %1326
    %1329 = vset.pattern.permute.xlu0 5
    %1330 = vperm.xlu0 %1329, %v45
    %v1331 = vpop.permute.xlu0 %1330
    %1333 = vset.pattern.permute.xlu0 5
    %1334 = vperm.xlu0 %1333, %v46
    %v1335 = vpop.permute.xlu0 %1334
    %1337 = vset.pattern.permute.xlu0 5
    %1338 = vperm.xlu0 %1337, %v47
    %v1339 = vpop.permute.xlu0 %1338
    %1341 = vset.pattern.permute.xlu0 5
    %1342 = vperm.xlu0 %1341, %v48
    %v1343 = vpop.permute.xlu0 %1342
    %1345 = vset.pattern.permute.xlu0 5
    %1346 = vperm.xlu0 %1345, %v49
    %v1347 = vpop.permute.xlu0 %1346
    %1349 = vset.pattern.permute.xlu0 5
    %1350 = vperm.xlu0 %1349, %v50
    %v1351 = vpop.permute.xlu0 %1350
    %1353 = vset.pattern.permute.xlu0 5
    %1354 = vperm.xlu0 %1353, %v51
    %v1355 = vpop.permute.xlu0 %1354
    %1357 = vset.pattern.permute.xlu0 5
    %1358 = vperm.xlu0 %1357, %v52
    %v1359 = vpop.permute.xlu0 %1358
    %1361 = vset.pattern.permute.xlu0 5
    %1362 = vperm.xlu0 %1361, %v53
    %v1363 = vpop.permute.xlu0 %1362
    %1365 = vset.pattern.permute.xlu0 5
    %1366 = vperm.xlu0 %1365, %v54
    %v1367 = vpop.permute.xlu0 %1366
    %1369 = vset.pattern.permute.xlu0 5
    %1370 = vperm.xlu0 %1369, %v55
    %v1371 = vpop.permute.xlu0 %1370
    %1373 = vset.pattern.permute.xlu0 5
    %1374 = vperm.xlu0 %1373, %v56
    %v1375 = vpop.permute.xlu0 %1374
    %1377 = vset.pattern.permute.xlu0 5
    %1378 = vperm.xlu0 %1377, %v57
    %v1379 = vpop.permute.xlu0 %1378
    %1381 = vset.pattern.permute.xlu0 5
    %1382 = vperm.xlu0 %1381, %v58
    %v1383 = vpop.permute.xlu0 %1382
    %1385 = vset.pattern.permute.xlu0 5
    %1386 = vperm.xlu0 %1385, %v59
    %v1387 = vpop.permute.xlu0 %1386
    %1389 = vset.pattern.permute.xlu0 5
    %1390 = vperm.xlu0 %1389, %v60
    %v1391 = vpop.permute.xlu0 %1390
    %v1393 = vlaneseq
    %v1394 = vshrl.u32 %v1393, 7
    %v1395 = vsub.s32 5, %v1394
    %v1396 = vrot.slane %v28, %v1395
    %v1397 = vmul.f32 %v1267, %v1396
    %v1398 = vmul.f32 %v1271, %v1396
    %v1399 = vmul.f32 %v1275, %v1396
    %v1400 = vmul.f32 %v1279, %v1396
    %v1401 = vmul.f32 %v1283, %v1396
    %v1402 = vmul.f32 %v1287, %v1396
    %v1403 = vmul.f32 %v1291, %v1396
    %v1404 = vmul.f32 %v1295, %v1396
    %v1405 = vmul.f32 %v1299, %v1396
    %v1406 = vmul.f32 %v1303, %v1396
    %v1407 = vmul.f32 %v1307, %v1396
    %v1408 = vmul.f32 %v1311, %v1396
    %v1409 = vmul.f32 %v1315, %v1396
    %v1410 = vmul.f32 %v1319, %v1396
    %v1411 = vmul.f32 %v1323, %v1396
    %v1412 = vmul.f32 %v1327, %v1396
    %v1413 = vmul.f32 %v1331, %v1396
    %v1414 = vmul.f32 %v1335, %v1396
    %v1415 = vmul.f32 %v1339, %v1396
    %v1416 = vmul.f32 %v1343, %v1396
    %v1417 = vmul.f32 %v1347, %v1396
    %v1418 = vmul.f32 %v1351, %v1396
    %v1419 = vmul.f32 %v1355, %v1396
    %v1420 = vmul.f32 %v1359, %v1396
    %v1421 = vmul.f32 %v1363, %v1396
    %v1422 = vmul.f32 %v1367, %v1396
    %v1423 = vmul.f32 %v1371, %v1396
    %v1424 = vmul.f32 %v1375, %v1396
    %v1425 = vmul.f32 %v1379, %v1396
    %v1426 = vmul.f32 %v1383, %v1396
    %v1427 = vmul.f32 %v1387, %v1396
    %v1428 = vmul.f32 %v1391, %v1396
    %v1429 = vadd.f32 %v1233, %v1397
    %v1430 = vadd.f32 %v1234, %v1398
    %v1431 = vadd.f32 %v1235, %v1399
    %v1432 = vadd.f32 %v1236, %v1400
    %v1433 = vadd.f32 %v1237, %v1401
    %v1434 = vadd.f32 %v1238, %v1402
    %v1435 = vadd.f32 %v1239, %v1403
    %v1436 = vadd.f32 %v1240, %v1404
    %v1437 = vadd.f32 %v1241, %v1405
    %v1438 = vadd.f32 %v1242, %v1406
    %v1439 = vadd.f32 %v1243, %v1407
    %v1440 = vadd.f32 %v1244, %v1408
    %v1441 = vadd.f32 %v1245, %v1409
    %v1442 = vadd.f32 %v1246, %v1410
    %v1443 = vadd.f32 %v1247, %v1411
    %v1444 = vadd.f32 %v1248, %v1412
    %v1445 = vadd.f32 %v1249, %v1413
    %v1446 = vadd.f32 %v1250, %v1414
    %v1447 = vadd.f32 %v1251, %v1415
    %v1448 = vadd.f32 %v1252, %v1416
    %v1449 = vadd.f32 %v1253, %v1417
    %v1450 = vadd.f32 %v1254, %v1418
    %v1451 = vadd.f32 %v1255, %v1419
    %v1452 = vadd.f32 %v1256, %v1420
    %v1453 = vadd.f32 %v1257, %v1421
    %v1454 = vadd.f32 %v1258, %v1422
    %v1455 = vadd.f32 %v1259, %v1423
    %v1456 = vadd.f32 %v1260, %v1424
    %v1457 = vadd.f32 %v1261, %v1425
    %v1458 = vadd.f32 %v1262, %v1426
    %v1459 = vadd.f32 %v1263, %v1427
    %v1460 = vadd.f32 %v1264, %v1428
    %v1461 = vmax.f32 %v1429, 0.0
    %v1462 = vmax.f32 %v1430, 0.0
    %v1463 = vmax.f32 %v1431, 0.0
    %v1464 = vmax.f32 %v1432, 0.0
    %v1465 = vmax.f32 %v1433, 0.0
    %v1466 = vmax.f32 %v1434, 0.0
    %v1467 = vmax.f32 %v1435, 0.0
    %v1468 = vmax.f32 %v1436, 0.0
    %v1469 = vmax.f32 %v1437, 0.0
    %v1470 = vmax.f32 %v1438, 0.0
    %v1471 = vmax.f32 %v1439, 0.0
    %v1472 = vmax.f32 %v1440, 0.0
    %v1473 = vmax.f32 %v1441, 0.0
    %v1474 = vmax.f32 %v1442, 0.0
    %v1475 = vmax.f32 %v1443, 0.0
    %v1476 = vmax.f32 %v1444, 0.0
    %v1477 = vmax.f32 %v1445, 0.0
    %v1478 = vmax.f32 %v1446, 0.0
    %v1479 = vmax.f32 %v1447, 0.0
    %v1480 = vmax.f32 %v1448, 0.0
    %v1481 = vmax.f32 %v1449, 0.0
    %v1482 = vmax.f32 %v1450, 0.0
    %v1483 = vmax.f32 %v1451, 0.0
    %v1484 = vmax.f32 %v1452, 0.0
    %v1485 = vmax.f32 %v1453, 0.0
    %v1486 = vmax.f32 %v1454, 0.0
    %v1487 = vmax.f32 %v1455, 0.0
    %v1488 = vmax.f32 %v1456, 0.0
    %v1489 = vmax.f32 %v1457, 0.0
    %v1490 = vmax.f32 %v1458, 0.0
    %v1491 = vmax.f32 %v1459, 0.0
    %v1492 = vmax.f32 %v1460, 0.0
    %v1493 = vld [vmem:[%s3] sm:$0xff]
    %v1494 = vld [vmem:[%s3 + $0x8] sm:$0xff]
    %v1495 = vld [vmem:[%s3 + $0x10] sm:$0xff]
    %v1496 = vld [vmem:[%s3 + $0x18] sm:$0xff]
    %v1497 = vld [vmem:[%s3 + $0x20] sm:$0xff]
    %v1498 = vld [vmem:[%s3 + $0x28] sm:$0xff]
    %v1499 = vld [vmem:[%s3 + $0x30] sm:$0xff]
    %v1500 = vld [vmem:[%s3 + $0x38] sm:$0xff]
    %v1501 = vld [vmem:[%s3 + $0x40] sm:$0xff]
    %v1502 = vld [vmem:[%s3 + $0x48] sm:$0xff]
    %v1503 = vld [vmem:[%s3 + $0x50] sm:$0xff]
    %v1504 = vld [vmem:[%s3 + $0x58] sm:$0xff]
    %v1505 = vld [vmem:[%s3 + $0x60] sm:$0xff]
    %v1506 = vld [vmem:[%s3 + $0x68] sm:$0xff]
    %v1507 = vld [vmem:[%s3 + $0x70] sm:$0xff]
    %v1508 = vld [vmem:[%s3 + $0x78] sm:$0xff]
    %v1509 = vpack.c.bf16 %v1462, %v1461
    %v1510 = vpack.c.bf16 %v1464, %v1463
    %v1511 = vpack.c.bf16 %v1466, %v1465
    %v1512 = vpack.c.bf16 %v1468, %v1467
    %v1513 = vpack.c.bf16 %v1470, %v1469
    %v1514 = vpack.c.bf16 %v1472, %v1471
    %v1515 = vpack.c.bf16 %v1474, %v1473
    %v1516 = vpack.c.bf16 %v1476, %v1475
    %v1517 = vpack.c.bf16 %v1478, %v1477
    %v1518 = vpack.c.bf16 %v1480, %v1479
    %v1519 = vpack.c.bf16 %v1482, %v1481
    %v1520 = vpack.c.bf16 %v1484, %v1483
    %v1521 = vpack.c.bf16 %v1486, %v1485
    %v1522 = vpack.c.bf16 %v1488, %v1487
    %v1523 = vpack.c.bf16 %v1490, %v1489
    %v1524 = vpack.c.bf16 %v1492, %v1491
    %v1525 = vld [vmem:[%s4] sm:$0xff]
    %v1526 = vld [vmem:[%s4 + $0x8] sm:$0xff]
    %v1527 = vld [vmem:[%s4 + $0x10] sm:$0xff]
    %v1528 = vld [vmem:[%s4 + $0x18] sm:$0xff]
    %v1529 = vld [vmem:[%s4 + $0x20] sm:$0xff]
    %v1530 = vld [vmem:[%s4 + $0x28] sm:$0xff]
    %v1531 = vld [vmem:[%s4 + $0x30] sm:$0xff]
    %v1532 = vld [vmem:[%s4 + $0x38] sm:$0xff]
    %v1533 = vld [vmem:[%s4 + $0x40] sm:$0xff]
    %v1534 = vld [vmem:[%s4 + $0x48] sm:$0xff]
    %v1535 = vld [vmem:[%s4 + $0x50] sm:$0xff]
    %v1536 = vld [vmem:[%s4 + $0x58] sm:$0xff]
    %v1537 = vld [vmem:[%s4 + $0x60] sm:$0xff]
    %v1538 = vld [vmem:[%s4 + $0x68] sm:$0xff]
    %v1539 = vld [vmem:[%s4 + $0x70] sm:$0xff]
    %v1540 = vld [vmem:[%s4 + $0x78] sm:$0xff]
    %1542 = vset.pattern.permute.xlu0 0
    %1543 = vperm.xlu0 %1542, %v1525
    %v1544 = vpop.permute.xlu0 %1543
    %1547 = vset.pattern.permute.xlu0 0
    %1548 = vperm.xlu0 %1547, %v1526
    %v1549 = vpop.permute.xlu0 %1548
    %1552 = vset.pattern.permute.xlu0 0
    %1553 = vperm.xlu0 %1552, %v1527
    %v1554 = vpop.permute.xlu0 %1553
    %1557 = vset.pattern.permute.xlu0 0
    %1558 = vperm.xlu0 %1557, %v1528
    %v1559 = vpop.permute.xlu0 %1558
    %1562 = vset.pattern.permute.xlu0 0
    %1563 = vperm.xlu0 %1562, %v1529
    %v1564 = vpop.permute.xlu0 %1563
    %1567 = vset.pattern.permute.xlu0 0
    %1568 = vperm.xlu0 %1567, %v1530
    %v1569 = vpop.permute.xlu0 %1568
    %1572 = vset.pattern.permute.xlu0 0
    %1573 = vperm.xlu0 %1572, %v1531
    %v1574 = vpop.permute.xlu0 %1573
    %1577 = vset.pattern.permute.xlu0 0
    %1578 = vperm.xlu0 %1577, %v1532
    %v1579 = vpop.permute.xlu0 %1578
    %1582 = vset.pattern.permute.xlu0 0
    %1583 = vperm.xlu0 %1582, %v1533
    %v1584 = vpop.permute.xlu0 %1583
    %1587 = vset.pattern.permute.xlu0 0
    %1588 = vperm.xlu0 %1587, %v1534
    %v1589 = vpop.permute.xlu0 %1588
    %1592 = vset.pattern.permute.xlu0 0
    %1593 = vperm.xlu0 %1592, %v1535
    %v1594 = vpop.permute.xlu0 %1593
    %1597 = vset.pattern.permute.xlu0 0
    %1598 = vperm.xlu0 %1597, %v1536
    %v1599 = vpop.permute.xlu0 %1598
    %1602 = vset.pattern.permute.xlu0 0
    %1603 = vperm.xlu0 %1602, %v1537
    %v1604 = vpop.permute.xlu0 %1603
    %1607 = vset.pattern.permute.xlu0 0
    %1608 = vperm.xlu0 %1607, %v1538
    %v1609 = vpop.permute.xlu0 %1608
    %1612 = vset.pattern.permute.xlu0 0
    %1613 = vperm.xlu0 %1612, %v1539
    %v1614 = vpop.permute.xlu0 %1613
    %1617 = vset.pattern.permute.xlu0 0
    %1618 = vperm.xlu0 %1617, %v1540
    %v1619 = vpop.permute.xlu0 %1618
    %v1637 = vunpack.c.l.b16 %v1493
    %v1638 = vunpack.c.h.b16 %v1493
    %v1639 = vunpack.c.l.b16 %v1494
    %v1640 = vunpack.c.h.b16 %v1494
    %v1641 = vunpack.c.l.b16 %v1495
    %v1642 = vunpack.c.h.b16 %v1495
    %v1643 = vunpack.c.l.b16 %v1496
    %v1644 = vunpack.c.h.b16 %v1496
    %v1645 = vunpack.c.l.b16 %v1497
    %v1646 = vunpack.c.h.b16 %v1497
    %v1647 = vunpack.c.l.b16 %v1498
    %v1648 = vunpack.c.h.b16 %v1498
    %v1649 = vunpack.c.l.b16 %v1499
    %v1650 = vunpack.c.h.b16 %v1499
    %v1651 = vunpack.c.l.b16 %v1500
    %v1652 = vunpack.c.h.b16 %v1500
    %v1653 = vunpack.c.l.b16 %v1501
    %v1654 = vunpack.c.h.b16 %v1501
    %v1655 = vunpack.c.l.b16 %v1502
    %v1656 = vunpack.c.h.b16 %v1502
    %v1657 = vunpack.c.l.b16 %v1503
    %v1658 = vunpack.c.h.b16 %v1503
    %v1659 = vunpack.c.l.b16 %v1504
    %v1660 = vunpack.c.h.b16 %v1504
    %v1661 = vunpack.c.l.b16 %v1505
    %v1662 = vunpack.c.h.b16 %v1505
    %v1663 = vunpack.c.l.b16 %v1506
    %v1664 = vunpack.c.h.b16 %v1506
    %v1665 = vunpack.c.l.b16 %v1507
    %v1666 = vunpack.c.h.b16 %v1507
    %v1667 = vunpack.c.l.b16 %v1508
    %v1668 = vunpack.c.h.b16 %v1508
    %v1669 = vpack.c.b16 %v1639, %v1637
    %v1670 = vpack.c.b16 %v1640, %v1638
    %v1671 = vpack.c.b16 %v1643, %v1641
    %v1672 = vpack.c.b16 %v1644, %v1642
    %v1673 = vpack.c.b16 %v1647, %v1645
    %v1674 = vpack.c.b16 %v1648, %v1646
    %v1675 = vpack.c.b16 %v1651, %v1649
    %v1676 = vpack.c.b16 %v1652, %v1650
    %v1677 = vpack.c.b16 %v1655, %v1653
    %v1678 = vpack.c.b16 %v1656, %v1654
    %v1679 = vpack.c.b16 %v1659, %v1657
    %v1680 = vpack.c.b16 %v1660, %v1658
    %v1681 = vpack.c.b16 %v1663, %v1661
    %v1682 = vpack.c.b16 %v1664, %v1662
    %v1683 = vpack.c.b16 %v1667, %v1665
    %v1684 = vpack.c.b16 %v1668, %v1666
    %1701 = vmatprep.subr.bf16.mxu0 0
    %1702 = vmatpush1.bf16.msra.mxu0 %v1509
    %1703 = vmatprep.subr.bf16.mxu0 0
    %1704 = vmatpush1.bf16.msra.mxu0 %v1510
    %1705 = vmatprep.subr.bf16.mxu0 0
    %1706 = vmatpush1.bf16.msra.mxu0 %v1511
    %1707 = vmatprep.subr.bf16.mxu0 0
    %1708 = vmatpush1.bf16.msra.mxu0 %v1512
    %1709 = vmatprep.subr.bf16.mxu0 0
    %1710 = vmatpush1.bf16.msra.mxu0 %v1513
    %1711 = vmatprep.subr.bf16.mxu0 0
    %1712 = vmatpush1.bf16.msra.mxu0 %v1514
    %1713 = vmatprep.subr.bf16.mxu0 0
    %1714 = vmatpush1.bf16.msra.mxu0 %v1515
    %1715 = vmatprep.subr.bf16.mxu0 0
    %1716 = vmatpush1.bf16.msra.mxu0 %v1516
    %1717 = vmatprep.subr.bf16.mxu0 0
    %1718 = vmatpush1.bf16.msra.mxu0 %v1517
    %1719 = vmatprep.subr.bf16.mxu0 0
    %1720 = vmatpush1.bf16.msra.mxu0 %v1518
    %1721 = vmatprep.subr.bf16.mxu0 0
    %1722 = vmatpush1.bf16.msra.mxu0 %v1519
    %1723 = vmatprep.subr.bf16.mxu0 0
    %1724 = vmatpush1.bf16.msra.mxu0 %v1520
    %1725 = vmatprep.subr.bf16.mxu0 0
    %1726 = vmatpush1.bf16.msra.mxu0 %v1521
    %1727 = vmatprep.subr.bf16.mxu0 0
    %1728 = vmatpush1.bf16.msra.mxu0 %v1522
    %1729 = vmatprep.subr.bf16.mxu0 0
    %1730 = vmatpush1.bf16.msra.mxu0 %v1523
    %1731 = vmatprep.subr.bf16.mxu0 0
    %1732 = vmatpush1.bf16.msra.mxu0 %v1524
    %1733 = vmatprep.mubr.bf16.mxu0 %v1670
    %1734 = vmatmul.mubr.bf16.gmra.mrb[0].mxu0 %v1669
    %v1735 = vpop.f32.mrb[0].mxu0
    %v1736 = vadd.f32 %v1544, %v1735
    %v1737 = vpop.f32.mrb[0].mxu0
    %v1738 = vpop.f32.mrb[0].mxu0
    %v1739 = vadd.f32 %v1549, %v1738
    %v1740 = vpop.f32.mrb[0].mxu0
    %1741 = vmatprep.mubr.bf16.mxu0 %v1672
    %1742 = vmatmul.mubr.bf16.gmra.mrb[0].mxu0 %v1671
    %v1743 = vpop.f32.mrb[0].mxu0
    %v1744 = vadd.f32 %v1554, %v1743
    %v1745 = vpop.f32.mrb[0].mxu0
    %v1746 = vpop.f32.mrb[0].mxu0
    %v1747 = vadd.f32 %v1559, %v1746
    %v1748 = vpop.f32.mrb[0].mxu0
    %1749 = vmatprep.mubr.bf16.mxu0 %v1674
    %1750 = vmatmul.mubr.bf16.gmra.mrb[0].mxu0 %v1673
    %v1751 = vpop.f32.mrb[0].mxu0
    %v1752 = vadd.f32 %v1564, %v1751
    %v1753 = vpop.f32.mrb[0].mxu0
    %v1754 = vpop.f32.mrb[0].mxu0
    %v1755 = vadd.f32 %v1569, %v1754
    %v1756 = vpop.f32.mrb[0].mxu0
    %1757 = vmatprep.mubr.bf16.mxu0 %v1676
    %1758 = vmatmul.mubr.bf16.gmra.mrb[0].mxu0 %v1675
    %v1759 = vpop.f32.mrb[0].mxu0
    %v1760 = vadd.f32 %v1574, %v1759
    %v1761 = vpop.f32.mrb[0].mxu0
    %v1762 = vpop.f32.mrb[0].mxu0
    %v1763 = vadd.f32 %v1579, %v1762
    %v1764 = vpop.f32.mrb[0].mxu0
    %1765 = vmatprep.mubr.bf16.mxu0 %v1678
    %1766 = vmatmul.mubr.bf16.gmra.mrb[0].mxu0 %v1677
    %v1767 = vpop.f32.mrb[0].mxu0
    %v1768 = vadd.f32 %v1584, %v1767
    %v1769 = vpop.f32.mrb[0].mxu0
    %v1770 = vpop.f32.mrb[0].mxu0
    %v1771 = vadd.f32 %v1589, %v1770
    %v1772 = vpop.f32.mrb[0].mxu0
    %1773 = vmatprep.mubr.bf16.mxu0 %v1680
    %1774 = vmatmul.mubr.bf16.gmra.mrb[0].mxu0 %v1679
    %v1775 = vpop.f32.mrb[0].mxu0
    %v1776 = vadd.f32 %v1594, %v1775
    %v1777 = vpop.f32.mrb[0].mxu0
    %v1778 = vpop.f32.mrb[0].mxu0
    %v1779 = vadd.f32 %v1599, %v1778
    %v1780 = vpop.f32.mrb[0].mxu0
    %1781 = vmatprep.mubr.bf16.mxu0 %v1682
    %1782 = vmatmul.mubr.bf16.gmra.mrb[0].mxu0 %v1681
    %v1783 = vpop.f32.mrb[0].mxu0
    %v1784 = vadd.f32 %v1604, %v1783
    %v1785 = vpop.f32.mrb[0].mxu0
    %v1786 = vpop.f32.mrb[0].mxu0
    %v1787 = vadd.f32 %v1609, %v1786
    %v1788 = vpop.f32.mrb[0].mxu0
    %1789 = vmatprep.mubr.bf16.mxu0 %v1684
    %1790 = vmatmul.mubr.bf16.gmra.mrb[0].mxu0 %v1683
    %v1791 = vpop.f32.mrb[0].mxu0
    %v1792 = vadd.f32 %v1614, %v1791
    %v1793 = vpop.f32.mrb[0].mxu0
    %v1794 = vpop.f32.mrb[0].mxu0
    %v1795 = vadd.f32 %v1619, %v1794
    %v1796 = vpop.f32.mrb[0].mxu0
    %1797 = vdwg.mxu0
    %v1798 = vmax.f32 %v1736, 0.0
    %v1799 = vmax.f32 %v1739, 0.0
    %v1800 = vmax.f32 %v1744, 0.0
    %v1801 = vmax.f32 %v1747, 0.0
    %v1802 = vmax.f32 %v1752, 0.0
    %v1803 = vmax.f32 %v1755, 0.0
    %v1804 = vmax.f32 %v1760, 0.0
    %v1805 = vmax.f32 %v1763, 0.0
    %v1806 = vmax.f32 %v1768, 0.0
    %v1807 = vmax.f32 %v1771, 0.0
    %v1808 = vmax.f32 %v1776, 0.0
    %v1809 = vmax.f32 %v1779, 0.0
    %v1810 = vmax.f32 %v1784, 0.0
    %v1811 = vmax.f32 %v1787, 0.0
    %v1812 = vmax.f32 %v1792, 0.0
    %v1813 = vmax.f32 %v1795, 0.0
    %v1814 = vld [vmem:[%s5] sm:$0x7]
    %v1815 = vpack.c.bf16 %v1799, %v1798
    %v1816 = vpack.c.bf16 %v1801, %v1800
    %v1817 = vpack.c.bf16 %v1803, %v1802
    %v1818 = vpack.c.bf16 %v1805, %v1804
    %v1819 = vpack.c.bf16 %v1807, %v1806
    %v1820 = vpack.c.bf16 %v1809, %v1808
    %v1821 = vpack.c.bf16 %v1811, %v1810
    %v1822 = vpack.c.bf16 %v1813, %v1812
    %v1823 = vld [vmem:[%s6] sm:$0x1f]
    %1825 = vset.pattern.permute.xlu0 0
    %1826 = vperm.xlu0 %1825, %v1823
    %v1827 = vpop.permute.xlu0 %1826
    %1829 = vmatprep.subr.bf16.mxu0 0
    %1830 = vmatpush1.bf16.msra.mxu0 %v1815
    %1831 = vmatprep.subr.bf16.mxu0 0
    %1832 = vmatpush1.bf16.msra.mxu0 %v1816
    %1833 = vmatprep.subr.bf16.mxu0 0
    %1834 = vmatpush1.bf16.msra.mxu0 %v1817
    %1835 = vmatprep.subr.bf16.mxu0 0
    %1836 = vmatpush1.bf16.msra.mxu0 %v1818
    %1837 = vmatprep.subr.bf16.mxu0 0
    %1838 = vmatpush1.bf16.msra.mxu0 %v1819
    %1839 = vmatprep.subr.bf16.mxu0 0
    %1840 = vmatpush1.bf16.msra.mxu0 %v1820
    %1841 = vmatprep.subr.bf16.mxu0 0
    %1842 = vmatpush1.bf16.msra.mxu0 %v1821
    %1843 = vmatprep.subr.bf16.mxu0 0
    %1844 = vmatpush1.bf16.msra.mxu0 %v1822
    %1845 = vmatprep.subr.bf16.mxu0 0
    %1846 = vmatpush1.bf16.msra.mxu0 0
    %1847 = vmatprep.subr.bf16.mxu0 0
    %1848 = vmatpush1.bf16.msra.mxu0 0
    %1849 = vmatprep.subr.bf16.mxu0 0
    %1850 = vmatpush1.bf16.msra.mxu0 0
    %1851 = vmatprep.subr.bf16.mxu0 0
    %1852 = vmatpush1.bf16.msra.mxu0 0
    %1853 = vmatprep.subr.bf16.mxu0 0
    %1854 = vmatpush1.bf16.msra.mxu0 0
    %1855 = vmatprep.subr.bf16.mxu0 0
    %1856 = vmatpush1.bf16.msra.mxu0 0
    %1857 = vmatprep.subr.bf16.mxu0 0
    %1858 = vmatpush1.bf16.msra.mxu0 0
    %1859 = vmatprep.subr.bf16.mxu0 0
    %1860 = vmatpush1.bf16.msra.mxu0 0
    %1861 = vmatprep.mubr.bf16.mxu0 0
    %1862 = vmatmul.mubr.bf16.gmra.mrb[0].mxu0 %v1814
    %v1863 = vpop.f32.mrb[0].mxu0
    %v1864 = vadd.f32 %v1827, %v1863
    %v1865 = vpop.f32.mrb[0].mxu0
    %v1866 = vpop.f32.mrb[0].mxu0
    %v1867 = vpop.f32.mrb[0].mxu0
    %1868 = vdwg.mxu0
    %1869 = vst [vmem:[#allocation2] sm:$0x1f] %v1864
    // Predicated region
    $region30: #{dqn_forward.1} parent=1 // pred_check
      _
    $region31: #{dqn_forward.1} parent=1 // pred_check_branch
      %1871 = sbr.rel (0) target = $region33
    $region32: #{dqn_forward.1} parent=1 // pred_region
      %s1873 = ssub.s32 128, 128
      %1874 = vsyncadd [#allocation3], %s1873
      %s1876 = sshll.u32 [#allocation2], 4
      %s1877 = int_to_ptr.vmem [resolvable:$true] %s1876
      %1879 = dma.vmem_to_hbm [thread:$0]  %s1877, 128, %s7, [#allocation3]
    $region33: #{dqn_forward.1} parent=1 // pred_fallthru
      _
    // Predicated region
    $region34: #{dqn_forward.1} parent=1 // pred_check
      _
    $region35: #{dqn_forward.1} parent=1 // pred_check_branch
      %1881 = sbr.rel (0) target = $region37
    $region36: #{dqn_forward.1} parent=1 // pred_region
      %1882 = dma.done [#allocation3], 128
    $region37: #{dqn_forward.1} parent=1 // pred_fallthru
      _
    %1883 = vsyncpa [#allocation3], 1

</llo_original>
